<compile_context>
chip_gen: v7x
topology: tpu7x:2x2x1
jax: 0.10.0
libtpu: 0.0.40
codegen_flags: <defaults>
</compile_context>

<pallas_src>
import numpy as np
import jax
import jax.numpy as jnp
from jax.experimental import pallas as pl
from jax.experimental.pallas import tpu as pltpu


def _round_up(x, m):
    return ((x + m - 1) // m) * m


def _make_kernel(N, M, n_layers, in_ws, out_ws, matmul_dtype):
    """in_ws / out_ws: static per-layer (8-rounded) contraction / output widths."""

    def kernel(x0_ref, w_ref, b_ref, e_ref, s_ref, out_ref):
        x0 = x0_ref[...]                                     # (N, TILE_B) f32

        # ---- fused diag+offdiag MLP (block-diagonal weights, batch on lanes).
        # NOTE: the fusion relies on tanh(0) == 0 and zero weight/bias padding
        # so padded rows stay exactly zero between layers; do not change the
        # activation to one with f(0) != 0 without revisiting the padding.
        h = x0
        for l in range(n_layers):
            w = w_ref[l, :out_ws[l], :in_ws[l]]              # static slice, real widths
            b = b_ref[:out_ws[l], l:l + 1]                   # (out_w, 1) bias column
            h = jnp.dot(w.astype(matmul_dtype), h.astype(matmul_dtype),
                        preferred_element_type=jnp.float32) + b
            if l < n_layers - 1:
                h = jnp.tanh(h)

        raw_diag = h[:N, :]                                  # diag-branch output
        z = h[N:N + M, :]                                    # offdiag-branch output
        dmin = b_ref[:N, n_layers:n_layers + 1]              # damp_min, (N, 1)

        # diag of L
        diag = (jnp.maximum(raw_diag, 0.0) + dmin) * x0      # (N, TILE_B)

        # strict-lower part of L via factored one-hot gather/scatter matmuls
        # (O(M*N) work, no (M, N*N) constant, no lane->sublane reshape).
        x0_rows = jnp.dot(e_ref[0], x0,
                          preferred_element_type=jnp.float32)         # x0[rows[k], b]
        u = (jnp.dot(s_ref[0], z * x0_rows,
                     preferred_element_type=jnp.float32)
             + diag * x0)                                    # u = L^T x0
        u_cols = jnp.dot(e_ref[1], u,
                         preferred_element_type=jnp.float32)          # u[cols[k], b]
        y = (jnp.dot(s_ref[1], z * u_cols,
                     preferred_element_type=jnp.float32)
             + diag * u)                                     # y = L u = D

        out_ref[...] = y.astype(out_ref.dtype)               # single lane-dense store

    return kernel


def _pack_params(N, M, diag_params, off_params, damp_min):
    """Fuse both MLP branches into one block-diagonal TRANSPOSED weight slab.

    Per layer l (rows = outputs, cols = inputs):
      Ws[l][:out_d, :in_d]                          = W_diag_l.T
      Ws[l][out_d:out_d+out_o, off_c:off_c+in_o]    = W_offdiag_l.T
    where off_c == 0 for l == 0 (both branches read x0) and == in_d otherwise.
    bs column l holds the fused bias; the last column holds damp_min.
    """
    n_layers = len(diag_params)
    assert len(off_params) == n_layers, "diag/offdiag depth mismatch"

    # Track both branches' widths explicitly (they may differ) and assert.
    widths = []
    in_d = in_o = N
    for l in range(n_layers):
        Wd = np.asarray(diag_params[l][0], np.float32)
        Wo = np.asarray(off_params[l][0], np.float32)
        assert Wd.shape[0] == in_d, f"diag layer {l}: in {Wd.shape[0]} != {in_d}"
        assert Wo.shape[0] == in_o, f"offdiag layer {l}: in {Wo.shape[0]} != {in_o}"
        out_d, out_o = int(Wd.shape[1]), int(Wo.shape[1])
        fused_in = N if l == 0 else in_d + in_o
        widths.append((fused_in, in_d, out_d, out_o))
        in_d, in_o = out_d, out_o
    assert widths[-1][2] == N and widths[-1][3] == M, "output layer widths wrong"

    PW = _round_up(max(max(w[0] for w in widths),
                       max(w[2] + w[3] for w in widths)), 8)

    Ws = np.zeros((n_layers, PW, PW), np.float32)
    bs = np.zeros((PW, n_layers + 1), np.float32)
    out_ws = []
    for l, (fused_in, in_d, out_d, out_o) in enumerate(widths):
        Wd = np.asarray(diag_params[l][0], np.float32)
        bd = np.asarray(diag_params[l][1], np.float32)
        Wo = np.asarray(off_params[l][0], np.float32)
        bo = np.asarray(off_params[l][1], np.float32)
        off_c = 0 if l == 0 else in_d
        assert out_d + out_o <= PW and off_c + Wo.shape[0] <= PW
        Ws[l, :out_d, :Wd.shape[0]] = Wd.T
        Ws[l, out_d:out_d + out_o, off_c:off_c + Wo.shape[0]] = Wo.T
        bs[:out_d, l] = bd
        bs[out_d:out_d + out_o, l] = bo
        out_ws.append(_round_up(out_d + out_o, 8))

    dmin = np.asarray(damp_min, np.float32).reshape(-1)
    assert dmin.shape[0] == N, "damp_min not of correct shape"
    bs[:N, n_layers] = dmin

    in_ws = [N] + out_ws[:-1]
    return jnp.asarray(Ws), jnp.asarray(bs), in_ws, out_ws


def damping_forward(x0, damp_min, diag_params, off_params, *,
                    tile_b=None, matmul_dtype=jnp.float32):
    """x0: (B, N); damp_min: (N,); *_params: lists of (W(in,out), b(out,))."""
    x0 = jnp.asarray(x0, jnp.float32)
    B, N = x0.shape
    assert N >= 2, "full_mat Damping needs input_dim >= 2"
    M = N * (N - 1) // 2
    n_layers = len(diag_params)

    Ws, bs, in_ws, out_ws = _pack_params(N, M, diag_params, off_params, damp_min)
    PW = int(Ws.shape[1])

    # Tiny one-hot gather / scatter constants (O(M*N), replaces the O(N^3) scatter).
    rows, cols = np.tril_indices(N, k=-1)
    e_rows = np.zeros((M, N), np.float32); e_rows[np.arange(M), rows] = 1.0
    e_cols = np.zeros((M, N), np.float32); e_cols[np.arange(M), cols] = 1.0
    e_slab = jnp.asarray(np.stack([e_rows, e_cols]))        # (2, M, N) gathers
    s_slab = jnp.asarray(np.stack([e_cols.T, e_rows.T]))    # (2, N, M) scatters

    # Batch lives on lanes -> tile must be a multiple of 128.
    if tile_b is None:
        kind = ""
        try:
            kind = jax.devices()[0].device_kind.lower()
        except Exception:
            pass
        is_v5e = ("v5 lite" in kind) or ("v5e" in kind)
        # 256 fills the 256-wide v6e/v7x MXU when B is large while keeping >= 2
        # grid steps (so both v7x TensorCores get work); 128 matches v5e's MXU.
        tile_b = 256 if (not is_v5e and B > 256) else 128
    TILE_B = max(128, _round_up(tile_b, 128))
    B_pad = _round_up(B, TILE_B)

    x0t = jnp.pad(x0.T, ((0, 0), (0, B_pad - B)))            # (N, B_pad), batch on lanes

    kernel = _make_kernel(N, M, n_layers, in_ws, out_ws, matmul_dtype)
    grid = (B_pad // TILE_B,)

    cost = pl.CostEstimate(
        flops=int(2 * B_pad * (sum(i * o for i, o in zip(in_ws, out_ws)) + 4 * M * N)),
        transcendentals=int(B_pad * sum(out_ws[:-1])),
        bytes_accessed=int(4 * (x0t.size + Ws.size + bs.size
                                + e_slab.size + s_slab.size + B_pad * N)))

    def run(single_buffer_consts):
        def const_spec(shape):
            idx = lambda i, _n=len(shape): (0,) * _n
            if single_buffer_consts:
                # Grid-invariant blocks: one VMEM copy is enough.
                return pl.BlockSpec(shape, idx, pipeline_mode=pl.Buffered(1))
            return pl.BlockSpec(shape, idx)

        return pl.pallas_call(
            kernel,
            out_shape=jax.ShapeDtypeStruct((N, B_pad), jnp.float32),
            grid=grid,
            in_specs=[
                pl.BlockSpec((N, TILE_B), lambda i: (0, i)),   # x0 (batch on lanes)
                const_spec((n_layers, PW, PW)),                # fused weight slab
                const_spec((PW, n_layers + 1)),                # biases + damp_min
                const_spec((2, M, N)),                         # row/col gathers
                const_spec((2, N, M)),                         # col/row scatters
            ],
            out_specs=pl.BlockSpec((N, TILE_B), lambda i: (0, i)),
            compiler_params=pltpu.CompilerParams(
                dimension_semantics=("parallel",),
                vmem_limit_bytes=32 * 1024 * 1024),
            cost_estimate=cost,
        )(x0t, Ws, bs, e_slab, s_slab)

    try:
        out = run(single_buffer_consts=True)
    except Exception:
        # Fallback for JAX builds without pipeline_mode support on pallas_call:
        # default double-buffered constants (correctness unaffected).
        out = run(single_buffer_consts=False)

    return out[:, :B].T


# ---------------- pure-JAX reference (correctness check only) ----------------
def reference(x0, damp_min, diag_params, off_params):
    N = x0.shape[1]
    h = x0
    for W, b in diag_params[:-1]:
        h = jnp.tanh(h @ W + b)
    W, b = diag_params[-1]
    d = h @ W + b
    d = (jax.nn.relu(d) + damp_min) * x0
    z = x0
    for W, b in off_params[:-1]:
        z = jnp.tanh(z @ W + b)
    W, b = off_params[-1]
    z = z @ W + b
    rows, cols = np.tril_indices(N, k=-1)

    def per_sample(di, zi, xi):
        L = jnp.zeros((N, N), jnp.float32)
        L = L.at[rows, cols].set(zi)
        L = L.at[jnp.arange(N), jnp.arange(N)].set(di)
        return (L @ L.T) @ xi

    return jax.vmap(per_sample)(d, z, x0)


def _xavier_uniform(key, shape):
    fan_in, fan_out = shape
    bound = float(np.sqrt(6.0 / (fan_in + fan_out)))
    return jax.random.uniform(key, shape, jnp.float32, -bound, bound)


if __name__ == "__main__":
    B, N = 4, 8                      # batch, input_dim
    hidden_sizes = (32, 32)
    M = N * (N - 1) // 2

    key = jax.random.PRNGKey(0)
    keys = jax.random.split(key, 16)
    kit = iter(keys)

    def make_mlp(out_dim):
        params = []
        prev = N
        for s in hidden_sizes:
            params.append((_xavier_uniform(next(kit), (prev, s)),
                           0.01 * jax.random.normal(next(kit), (s,), jnp.float32)))
            prev = s
        params.append((_xavier_uniform(next(kit), (prev, out_dim)),
                       0.01 * jax.random.normal(next(kit), (out_dim,), jnp.float32)))
        return params

    diag_params = make_mlp(N)        # diag branch    -> N outputs
    off_params = make_mlp(M)         # offdiag branch -> N*(N-1)/2 outputs
    damp_min = 0.1 * jnp.ones((N,), jnp.float32)
    x0 = jax.random.normal(next(kit), (B, N), jnp.float32)

    out = damping_forward(x0, damp_min, diag_params, off_params)
    out = jax.block_until_ready(out)

    ref = reference(x0, damp_min, diag_params, off_params)
    assert np.allclose(np.asarray(out), np.asarray(ref), rtol=1e-4, atol=1e-4)
    print("KERNEL_OK")
</pallas_src>

<mosaic_0001>
module attributes {stable_mosaic.version = 11 : i64} {
  func.func @kernel(%arg0: i32, %arg1: memref<8x128xf32, #tpu.memory_space<vmem>>, %arg2: memref<3x64x64xf32, #tpu.memory_space<vmem>>, %arg3: memref<64x4xf32, #tpu.memory_space<vmem>>, %arg4: memref<2x28x8xf32, #tpu.memory_space<vmem>>, %arg5: memref<2x8x28xf32, #tpu.memory_space<vmem>>, %arg6: memref<8x128xf32, #tpu.memory_space<vmem>>) attributes {dimension_semantics = [#tpu.dimension_semantics<parallel>], iteration_bounds = array<i64: 1>, scalar_prefetch = 0 : i64, scratch_operands = 0 : i64, tpu.core_type = #tpu.core_type<tc>, window_params = [{transform_indices = @transform_0, window_bounds = array<i64: 8, 128>}, {pipeline_mode = #tpu.pipeline_mode<synchronous>, transform_indices = @transform_1, window_bounds = array<i64: 3, 64, 64>}, {pipeline_mode = #tpu.pipeline_mode<synchronous>, transform_indices = @transform_2, window_bounds = array<i64: 64, 4>}, {pipeline_mode = #tpu.pipeline_mode<synchronous>, transform_indices = @transform_3, window_bounds = array<i64: 2, 28, 8>}, {pipeline_mode = #tpu.pipeline_mode<synchronous>, transform_indices = @transform_4, window_bounds = array<i64: 2, 8, 28>}, {transform_indices = @transform_5, window_bounds = array<i64: 8, 128>}]} {
    %c0 = arith.constant 0 : index
    %c0_0 = arith.constant 0 : index
    %0 = vector.load %arg1[%c0, %c0_0] : memref<8x128xf32, #tpu.memory_space<vmem>>, vector<8x128xf32>
    %c0_1 = arith.constant 0 : index
    %c0_2 = arith.constant 0 : index
    %c0_3 = arith.constant 0 : index
    %1 = vector.load %arg2[%c0_1, %c0_2, %c0_3] : memref<3x64x64xf32, #tpu.memory_space<vmem>>, vector<1x64x8xf32>
    %2 = vector.shape_cast %1 : vector<1x64x8xf32> to vector<64x8xf32>
    %c0_4 = arith.constant 0 : index
    %c0_5 = arith.constant 0 : index
    %3 = vector.load %arg3[%c0_4, %c0_5] : memref<64x4xf32, #tpu.memory_space<vmem>>, vector<64x1xf32>
    %cst = arith.constant dense<0.000000e+00> : vector<64x128xf32>
    %4 = tpu.matmul %2, %0, %cst {dimension_numbers = #tpu.dot_dimension_numbers<[1], [0], [0], [1], [0, 0, 1, 1], [], []>} : vector<64x8xf32>, vector<8x128xf32>, vector<64x128xf32> -> vector<64x128xf32>
    %5 = vector.broadcast %3 : vector<64x1xf32> to vector<64x128xf32>
    %6 = arith.addf %4, %5 : vector<64x128xf32>
    %7 = math.tanh %6 : vector<64x128xf32>
    %c1 = arith.constant 1 : index
    %c0_6 = arith.constant 0 : index
    %c0_7 = arith.constant 0 : index
    %8 = vector.load %arg2[%c1, %c0_6, %c0_7] : memref<3x64x64xf32, #tpu.memory_space<vmem>>, vector<1x64x64xf32>
    %9 = vector.shape_cast %8 : vector<1x64x64xf32> to vector<64x64xf32>
    %c0_8 = arith.constant 0 : index
    %c1_9 = arith.constant 1 : index
    %10 = vector.load %arg3[%c0_8, %c1_9] : memref<64x4xf32, #tpu.memory_space<vmem>>, vector<64x1xf32>
    %cst_10 = arith.constant dense<0.000000e+00> : vector<64x128xf32>
    %11 = tpu.matmul %9, %7, %cst_10 {dimension_numbers = #tpu.dot_dimension_numbers<[1], [0], [0], [1], [0, 0, 1, 1], [], []>} : vector<64x64xf32>, vector<64x128xf32>, vector<64x128xf32> -> vector<64x128xf32>
    %12 = vector.broadcast %10 : vector<64x1xf32> to vector<64x128xf32>
    %13 = arith.addf %11, %12 : vector<64x128xf32>
    %14 = math.tanh %13 : vector<64x128xf32>
    %c2 = arith.constant 2 : index
    %c0_11 = arith.constant 0 : index
    %c0_12 = arith.constant 0 : index
    %15 = vector.load %arg2[%c2, %c0_11, %c0_12] : memref<3x64x64xf32, #tpu.memory_space<vmem>>, vector<1x40x64xf32>
    %16 = vector.shape_cast %15 : vector<1x40x64xf32> to vector<40x64xf32>
    %c0_13 = arith.constant 0 : index
    %c2_14 = arith.constant 2 : index
    %17 = vector.load %arg3[%c0_13, %c2_14] : memref<64x4xf32, #tpu.memory_space<vmem>>, vector<40x1xf32>
    %cst_15 = arith.constant dense<0.000000e+00> : vector<40x128xf32>
    %18 = tpu.matmul %16, %14, %cst_15 {dimension_numbers = #tpu.dot_dimension_numbers<[1], [0], [0], [1], [0, 0, 1, 1], [], []>} : vector<40x64xf32>, vector<64x128xf32>, vector<40x128xf32> -> vector<40x128xf32>
    %19 = vector.broadcast %17 : vector<40x1xf32> to vector<40x128xf32>
    %20 = arith.addf %18, %19 : vector<40x128xf32>
    %21 = vector.extract_strided_slice %20 {offsets = [0, 0], sizes = [8, 128], strides = [1, 1]} : vector<40x128xf32> to vector<8x128xf32>
    %22 = vector.extract_strided_slice %20 {offsets = [8, 0], sizes = [28, 128], strides = [1, 1]} : vector<40x128xf32> to vector<28x128xf32>
    %c0_16 = arith.constant 0 : index
    %c3 = arith.constant 3 : index
    %23 = vector.load %arg3[%c0_16, %c3] : memref<64x4xf32, #tpu.memory_space<vmem>>, vector<8x1xf32>
    %cst_17 = arith.constant 0.000000e+00 : f32
    %24 = vector.broadcast %cst_17 : f32 to vector<8x128xf32>
    %25 = arith.maximumf %21, %24 : vector<8x128xf32>
    %26 = vector.broadcast %23 : vector<8x1xf32> to vector<8x128xf32>
    %27 = arith.addf %25, %26 : vector<8x128xf32>
    %28 = arith.mulf %27, %0 : vector<8x128xf32>
    %c0_18 = arith.constant 0 : index
    %c0_19 = arith.constant 0 : index
    %c0_20 = arith.constant 0 : index
    %29 = vector.load %arg4[%c0_18, %c0_19, %c0_20] : memref<2x28x8xf32, #tpu.memory_space<vmem>>, vector<1x28x8xf32>
    %30 = vector.shape_cast %29 : vector<1x28x8xf32> to vector<28x8xf32>
    %cst_21 = arith.constant dense<0.000000e+00> : vector<28x128xf32>
    %31 = tpu.matmul %30, %0, %cst_21 {dimension_numbers = #tpu.dot_dimension_numbers<[1], [0], [0], [1], [0, 0, 1, 1], [], []>} : vector<28x8xf32>, vector<8x128xf32>, vector<28x128xf32> -> vector<28x128xf32>
    %c0_22 = arith.constant 0 : index
    %c0_23 = arith.constant 0 : index
    %c0_24 = arith.constant 0 : index
    %32 = vector.load %arg5[%c0_22, %c0_23, %c0_24] : memref<2x8x28xf32, #tpu.memory_space<vmem>>, vector<1x8x28xf32>
    %33 = vector.shape_cast %32 : vector<1x8x28xf32> to vector<8x28xf32>
    %34 = arith.mulf %22, %31 : vector<28x128xf32>
    %cst_25 = arith.constant dense<0.000000e+00> : vector<8x128xf32>
    %35 = tpu.matmul %33, %34, %cst_25 {dimension_numbers = #tpu.dot_dimension_numbers<[1], [0], [0], [1], [0, 0, 1, 1], [], []>} : vector<8x28xf32>, vector<28x128xf32>, vector<8x128xf32> -> vector<8x128xf32>
    %36 = arith.mulf %28, %0 : vector<8x128xf32>
    %37 = arith.addf %35, %36 : vector<8x128xf32>
    %c1_26 = arith.constant 1 : index
    %c0_27 = arith.constant 0 : index
    %c0_28 = arith.constant 0 : index
    %38 = vector.load %arg4[%c1_26, %c0_27, %c0_28] : memref<2x28x8xf32, #tpu.memory_space<vmem>>, vector<1x28x8xf32>
    %39 = vector.shape_cast %38 : vector<1x28x8xf32> to vector<28x8xf32>
    %cst_29 = arith.constant dense<0.000000e+00> : vector<28x128xf32>
    %40 = tpu.matmul %39, %37, %cst_29 {dimension_numbers = #tpu.dot_dimension_numbers<[1], [0], [0], [1], [0, 0, 1, 1], [], []>} : vector<28x8xf32>, vector<8x128xf32>, vector<28x128xf32> -> vector<28x128xf32>
    %c1_30 = arith.constant 1 : index
    %c0_31 = arith.constant 0 : index
    %c0_32 = arith.constant 0 : index
    %41 = vector.load %arg5[%c1_30, %c0_31, %c0_32] : memref<2x8x28xf32, #tpu.memory_space<vmem>>, vector<1x8x28xf32>
    %42 = vector.shape_cast %41 : vector<1x8x28xf32> to vector<8x28xf32>
    %43 = arith.mulf %22, %40 : vector<28x128xf32>
    %cst_33 = arith.constant dense<0.000000e+00> : vector<8x128xf32>
    %44 = tpu.matmul %42, %43, %cst_33 {dimension_numbers = #tpu.dot_dimension_numbers<[1], [0], [0], [1], [0, 0, 1, 1], [], []>} : vector<8x28xf32>, vector<28x128xf32>, vector<8x128xf32> -> vector<8x128xf32>
    %45 = arith.mulf %28, %37 : vector<8x128xf32>
    %46 = arith.addf %44, %45 : vector<8x128xf32>
    %c0_34 = arith.constant 0 : index
    %c0_35 = arith.constant 0 : index
    %47 = vector.load %arg6[%c0_34, %c0_35] : memref<8x128xf32, #tpu.memory_space<vmem>>, vector<8x128xf32>
    tpu.vector_store %arg6[%c0_34, %c0_35], %46 {strides = array<i32>} : memref<8x128xf32, #tpu.memory_space<vmem>>, vector<8x128xf32>,
    return
  }
  func.func @transform_0(%arg0: i32) -> (i32, i32) {
    %c0_i32 = arith.constant 0 : i32
    %c0_i32_0 = arith.constant 0 : i32
    return %c0_i32, %arg0 : i32, i32
  }
  func.func @transform_1(%arg0: i32) -> (i32, i32, i32) {
    %c0_i32 = arith.constant 0 : i32
    %c0_i32_0 = arith.constant 0 : i32
    %c0_i32_1 = arith.constant 0 : i32
    %c0_i32_2 = arith.constant 0 : i32
    return %c0_i32, %c0_i32_0, %c0_i32_1 : i32, i32, i32
  }
  func.func @transform_2(%arg0: i32) -> (i32, i32) {
    %c0_i32 = arith.constant 0 : i32
    %c0_i32_0 = arith.constant 0 : i32
    %c0_i32_1 = arith.constant 0 : i32
    return %c0_i32, %c0_i32_0 : i32, i32
  }
  func.func @transform_3(%arg0: i32) -> (i32, i32, i32) {
    %c0_i32 = arith.constant 0 : i32
    %c0_i32_0 = arith.constant 0 : i32
    %c0_i32_1 = arith.constant 0 : i32
    %c0_i32_2 = arith.constant 0 : i32
    return %c0_i32, %c0_i32_0, %c0_i32_1 : i32, i32, i32
  }
  func.func @transform_4(%arg0: i32) -> (i32, i32, i32) {
    %c0_i32 = arith.constant 0 : i32
    %c0_i32_0 = arith.constant 0 : i32
    %c0_i32_1 = arith.constant 0 : i32
    %c0_i32_2 = arith.constant 0 : i32
    return %c0_i32, %c0_i32_0, %c0_i32_1 : i32, i32, i32
  }
  func.func @transform_5(%arg0: i32) -> (i32, i32) {
    %c0_i32 = arith.constant 0 : i32
    %c0_i32_0 = arith.constant 0 : i32
    return %c0_i32, %arg0 : i32, i32
  }
}

module attributes {stable_mosaic.version = 11 : i64} {
  func.func @kernel(%arg0: i32, %arg1: memref<8x128xf32, #tpu.memory_space<vmem>>, %arg2: memref<3x64x64xf32, #tpu.memory_space<vmem>>, %arg3: memref<64x4xf32, #tpu.memory_space<vmem>>, %arg4: memref<2x28x8xf32, #tpu.memory_space<vmem>>, %arg5: memref<2x8x28xf32, #tpu.memory_space<vmem>>, %arg6: memref<8x128xf32, #tpu.memory_space<vmem>>) attributes {dimension_semantics = [#tpu.dimension_semantics<parallel>], iteration_bounds = array<i64: 1>, scalar_prefetch = 0 : i64, scratch_operands = 0 : i64, tpu.core_type = #tpu.core_type<tc>, window_params = [{transform_indices = @transform_0, window_bounds = array<i64: 8, 128>}, {pipeline_mode = #tpu.pipeline_mode<synchronous>, transform_indices = @transform_1, window_bounds = array<i64: 3, 64, 64>}, {pipeline_mode = #tpu.pipeline_mode<synchronous>, transform_indices = @transform_2, window_bounds = array<i64: 64, 4>}, {pipeline_mode = #tpu.pipeline_mode<synchronous>, transform_indices = @transform_3, window_bounds = array<i64: 2, 28, 8>}, {pipeline_mode = #tpu.pipeline_mode<synchronous>, transform_indices = @transform_4, window_bounds = array<i64: 2, 8, 28>}, {transform_indices = @transform_5, window_bounds = array<i64: 8, 128>}]} {
    %c0 = arith.constant 0 : index
    %c0_0 = arith.constant 0 : index
    %0 = vector.load %arg1[%c0, %c0_0] : memref<8x128xf32, #tpu.memory_space<vmem>>, vector<8x128xf32>
    %c0_1 = arith.constant 0 : index
    %c0_2 = arith.constant 0 : index
    %c0_3 = arith.constant 0 : index
    %1 = vector.load %arg2[%c0_1, %c0_2, %c0_3] : memref<3x64x64xf32, #tpu.memory_space<vmem>>, vector<1x64x8xf32>
    %2 = vector.shape_cast %1 : vector<1x64x8xf32> to vector<64x8xf32>
    %c0_4 = arith.constant 0 : index
    %c0_5 = arith.constant 0 : index
    %3 = vector.load %arg3[%c0_4, %c0_5] : memref<64x4xf32, #tpu.memory_space<vmem>>, vector<64x1xf32>
    %cst = arith.constant dense<0.000000e+00> : vector<64x128xf32>
    %4 = tpu.matmul %2, %0, %cst {dimension_numbers = #tpu.dot_dimension_numbers<[1], [0], [0], [1], [0, 0, 1, 1], [], []>} : vector<64x8xf32>, vector<8x128xf32>, vector<64x128xf32> -> vector<64x128xf32>
    %5 = vector.broadcast %3 : vector<64x1xf32> to vector<64x128xf32>
    %6 = arith.addf %4, %5 : vector<64x128xf32>
    %7 = math.tanh %6 : vector<64x128xf32>
    %c1 = arith.constant 1 : index
    %c0_6 = arith.constant 0 : index
    %c0_7 = arith.constant 0 : index
    %8 = vector.load %arg2[%c1, %c0_6, %c0_7] : memref<3x64x64xf32, #tpu.memory_space<vmem>>, vector<1x64x64xf32>
    %9 = vector.shape_cast %8 : vector<1x64x64xf32> to vector<64x64xf32>
    %c0_8 = arith.constant 0 : index
    %c1_9 = arith.constant 1 : index
    %10 = vector.load %arg3[%c0_8, %c1_9] : memref<64x4xf32, #tpu.memory_space<vmem>>, vector<64x1xf32>
    %cst_10 = arith.constant dense<0.000000e+00> : vector<64x128xf32>
    %11 = tpu.matmul %9, %7, %cst_10 {dimension_numbers = #tpu.dot_dimension_numbers<[1], [0], [0], [1], [0, 0, 1, 1], [], []>} : vector<64x64xf32>, vector<64x128xf32>, vector<64x128xf32> -> vector<64x128xf32>
    %12 = vector.broadcast %10 : vector<64x1xf32> to vector<64x128xf32>
    %13 = arith.addf %11, %12 : vector<64x128xf32>
    %14 = math.tanh %13 : vector<64x128xf32>
    %c2 = arith.constant 2 : index
    %c0_11 = arith.constant 0 : index
    %c0_12 = arith.constant 0 : index
    %15 = vector.load %arg2[%c2, %c0_11, %c0_12] : memref<3x64x64xf32, #tpu.memory_space<vmem>>, vector<1x40x64xf32>
    %16 = vector.shape_cast %15 : vector<1x40x64xf32> to vector<40x64xf32>
    %c0_13 = arith.constant 0 : index
    %c2_14 = arith.constant 2 : index
    %17 = vector.load %arg3[%c0_13, %c2_14] : memref<64x4xf32, #tpu.memory_space<vmem>>, vector<40x1xf32>
    %cst_15 = arith.constant dense<0.000000e+00> : vector<40x128xf32>
    %18 = tpu.matmul %16, %14, %cst_15 {dimension_numbers = #tpu.dot_dimension_numbers<[1], [0], [0], [1], [0, 0, 1, 1], [], []>} : vector<40x64xf32>, vector<64x128xf32>, vector<40x128xf32> -> vector<40x128xf32>
    %19 = vector.broadcast %17 : vector<40x1xf32> to vector<40x128xf32>
    %20 = arith.addf %18, %19 : vector<40x128xf32>
    %21 = vector.extract_strided_slice %20 {offsets = [0, 0], sizes = [8, 128], strides = [1, 1]} : vector<40x128xf32> to vector<8x128xf32>
    %22 = vector.extract_strided_slice %20 {offsets = [8, 0], sizes = [28, 128], strides = [1, 1]} : vector<40x128xf32> to vector<28x128xf32>
    %c0_16 = arith.constant 0 : index
    %c3 = arith.constant 3 : index
    %23 = vector.load %arg3[%c0_16, %c3] : memref<64x4xf32, #tpu.memory_space<vmem>>, vector<8x1xf32>
    %cst_17 = arith.constant 0.000000e+00 : f32
    %24 = vector.broadcast %cst_17 : f32 to vector<8x128xf32>
    %25 = arith.maximumf %21, %24 : vector<8x128xf32>
    %26 = vector.broadcast %23 : vector<8x1xf32> to vector<8x128xf32>
    %27 = arith.addf %25, %26 : vector<8x128xf32>
    %28 = arith.mulf %27, %0 : vector<8x128xf32>
    %c0_18 = arith.constant 0 : index
    %c0_19 = arith.constant 0 : index
    %c0_20 = arith.constant 0 : index
    %29 = vector.load %arg4[%c0_18, %c0_19, %c0_20] : memref<2x28x8xf32, #tpu.memory_space<vmem>>, vector<1x28x8xf32>
    %30 = vector.shape_cast %29 : vector<1x28x8xf32> to vector<28x8xf32>
    %cst_21 = arith.constant dense<0.000000e+00> : vector<28x128xf32>
    %31 = tpu.matmul %30, %0, %cst_21 {dimension_numbers = #tpu.dot_dimension_numbers<[1], [0], [0], [1], [0, 0, 1, 1], [], []>} : vector<28x8xf32>, vector<8x128xf32>, vector<28x128xf32> -> vector<28x128xf32>
    %c0_22 = arith.constant 0 : index
    %c0_23 = arith.constant 0 : index
    %c0_24 = arith.constant 0 : index
    %32 = vector.load %arg5[%c0_22, %c0_23, %c0_24] : memref<2x8x28xf32, #tpu.memory_space<vmem>>, vector<1x8x28xf32>
    %33 = vector.shape_cast %32 : vector<1x8x28xf32> to vector<8x28xf32>
    %34 = arith.mulf %22, %31 : vector<28x128xf32>
    %cst_25 = arith.constant dense<0.000000e+00> : vector<8x128xf32>
    %35 = tpu.matmul %33, %34, %cst_25 {dimension_numbers = #tpu.dot_dimension_numbers<[1], [0], [0], [1], [0, 0, 1, 1], [], []>} : vector<8x28xf32>, vector<28x128xf32>, vector<8x128xf32> -> vector<8x128xf32>
    %36 = arith.mulf %28, %0 : vector<8x128xf32>
    %37 = arith.addf %35, %36 : vector<8x128xf32>
    %c1_26 = arith.constant 1 : index
    %c0_27 = arith.constant 0 : index
    %c0_28 = arith.constant 0 : index
    %38 = vector.load %arg4[%c1_26, %c0_27, %c0_28] : memref<2x28x8xf32, #tpu.memory_space<vmem>>, vector<1x28x8xf32>
    %39 = vector.shape_cast %38 : vector<1x28x8xf32> to vector<28x8xf32>
    %cst_29 = arith.constant dense<0.000000e+00> : vector<28x128xf32>
    %40 = tpu.matmul %39, %37, %cst_29 {dimension_numbers = #tpu.dot_dimension_numbers<[1], [0], [0], [1], [0, 0, 1, 1], [], []>} : vector<28x8xf32>, vector<8x128xf32>, vector<28x128xf32> -> vector<28x128xf32>
    %c1_30 = arith.constant 1 : index
    %c0_31 = arith.constant 0 : index
    %c0_32 = arith.constant 0 : index
    %41 = vector.load %arg5[%c1_30, %c0_31, %c0_32] : memref<2x8x28xf32, #tpu.memory_space<vmem>>, vector<1x8x28xf32>
    %42 = vector.shape_cast %41 : vector<1x8x28xf32> to vector<8x28xf32>
    %43 = arith.mulf %22, %40 : vector<28x128xf32>
    %cst_33 = arith.constant dense<0.000000e+00> : vector<8x128xf32>
    %44 = tpu.matmul %42, %43, %cst_33 {dimension_numbers = #tpu.dot_dimension_numbers<[1], [0], [0], [1], [0, 0, 1, 1], [], []>} : vector<8x28xf32>, vector<28x128xf32>, vector<8x128xf32> -> vector<8x128xf32>
    %45 = arith.mulf %28, %37 : vector<8x128xf32>
    %46 = arith.addf %44, %45 : vector<8x128xf32>
    %c0_34 = arith.constant 0 : index
    %c0_35 = arith.constant 0 : index
    %47 = vector.load %arg6[%c0_34, %c0_35] : memref<8x128xf32, #tpu.memory_space<vmem>>, vector<8x128xf32>
    tpu.vector_store %arg6[%c0_34, %c0_35], %46 {strides = array<i32>} : memref<8x128xf32, #tpu.memory_space<vmem>>, vector<8x128xf32>,
    return
  }
  func.func @transform_0(%arg0: i32) -> (i32, i32) {
    %c0_i32 = arith.constant 0 : i32
    %c0_i32_0 = arith.constant 0 : i32
    return %c0_i32, %arg0 : i32, i32
  }
  func.func @transform_1(%arg0: i32) -> (i32, i32, i32) {
    %c0_i32 = arith.constant 0 : i32
    %c0_i32_0 = arith.constant 0 : i32
    %c0_i32_1 = arith.constant 0 : i32
    %c0_i32_2 = arith.constant 0 : i32
    return %c0_i32, %c0_i32_0, %c0_i32_1 : i32, i32, i32
  }
  func.func @transform_2(%arg0: i32) -> (i32, i32) {
    %c0_i32 = arith.constant 0 : i32
    %c0_i32_0 = arith.constant 0 : i32
    %c0_i32_1 = arith.constant 0 : i32
    return %c0_i32, %c0_i32_0 : i32, i32
  }
  func.func @transform_3(%arg0: i32) -> (i32, i32, i32) {
    %c0_i32 = arith.constant 0 : i32
    %c0_i32_0 = arith.constant 0 : i32
    %c0_i32_1 = arith.constant 0 : i32
    %c0_i32_2 = arith.constant 0 : i32
    return %c0_i32, %c0_i32_0, %c0_i32_1 : i32, i32, i32
  }
  func.func @transform_4(%arg0: i32) -> (i32, i32, i32) {
    %c0_i32 = arith.constant 0 : i32
    %c0_i32_0 = arith.constant 0 : i32
    %c0_i32_1 = arith.constant 0 : i32
    %c0_i32_2 = arith.constant 0 : i32
    return %c0_i32, %c0_i32_0, %c0_i32_1 : i32, i32, i32
  }
  func.func @transform_5(%arg0: i32) -> (i32, i32) {
    %c0_i32 = arith.constant 0 : i32
    %c0_i32_0 = arith.constant 0 : i32
    return %c0_i32, %arg0 : i32, i32
  }
}

</mosaic_0001>

<llo_original>
// kernel: tpu_custom_call.1
$region0: #{tpu_custom_call.1}
  #allocation0 [shape = 'u32[]', space=smem, size = 0x4, offset = 0x4, fixed_abs, tag = 'smem constant byte address 0x4 - core index']
  #allocation1 [shape = 'u32[144,128]{1,0:T(1,128)}', space=vmem, size = 0x12000, scoped, tag = 'internal scratch']
  %s0 = inlined_call_operand.vmem [shape: f32[8,128], index: 0, kind: input, shape index: {}]
  %s1 = inlined_call_operand.hbm [shape: f32[3,64,64], index: 1, kind: input, shape index: {}]
  %s2 = inlined_call_operand.vmem [shape: f32[64,4], index: 2, kind: input, shape index: {}]
  %s3 = inlined_call_operand.vmem [shape: f32[2,28,8], index: 3, kind: input, shape index: {}]
  %s4 = inlined_call_operand.vmem [shape: f32[2,8,28], index: 4, kind: input, shape index: {}]
  %s5 = inlined_call_operand.hbm [shape: f32[8,128], index: 5, kind: output, shape index: {}]
  %s6 = sld [smem:[#allocation0]]
  $region34: #{tpu_custom_call.1} parent=0
    _
  %s8 = ssub.s32 1, %s6
  %s9 = scalar_select 0, %s8, %s6
  $region1: #{tpu_custom_call.1} parent=0
    #allocation2 [shape = 'u8[98304]{0}', space=vmem, size = 0x18000, scoped, tag = 'input window, operand 1, single buffered']
    #allocation3 [shape = 's32[1]{0}', space=sflag, size = 0x4, scoped, tag = 'scoped memory for tpu_custom_call.1']
    #allocation4 [shape = 's32[1]{0}', space=sflag, size = 0x4, scoped, tag = 'scoped memory for tpu_custom_call.1']
    #allocation5 [shape = 'u8[4096]{0}', space=vmem, size = 0x1000, scoped, tag = 'output window, operand 0, single buffered']
    %10 = vsyncpa [#allocation3], 0
    %11 = vsyncpa [#allocation4], 0
    // Predicated region
    $region2: #{tpu_custom_call.1} parent=1 // pred_check
      _
    $region3: #{tpu_custom_call.1} parent=1 // pred_check_branch
      %13 = sbr.rel (0) target = $region5
    $region4: #{tpu_custom_call.1} parent=1 // pred_region
      _
    $region5: #{tpu_custom_call.1} parent=1 // pred_fallthru
      _
    // Predicated region
    $region6: #{tpu_custom_call.1} parent=1 // pred_check
      _
    $region7: #{tpu_custom_call.1} parent=1 // pred_check_branch
      %15 = sbr.rel (0) target = $region9
    $region8: #{tpu_custom_call.1} parent=1 // pred_region
      %s17 = ssub.s32 3072, 3072
      %18 = vsyncadd [#allocation3], %s17
      %s19 = sshll.u32 [#allocation2], 4
      %s20 = int_to_ptr.vmem [resolvable:$true] %s19
      %25 = dma.hbm_to_vmem [thread:$0]  %s1, 3072, %s20, [#allocation3], 128, 128, 8
    $region9: #{tpu_custom_call.1} parent=1 // pred_fallthru
      _
    // Predicated region
    $region10: #{tpu_custom_call.1} parent=1 // pred_check
      _
    $region11: #{tpu_custom_call.1} parent=1 // pred_check_branch
      %27 = sbr.rel (0) target = $region13
    $region12: #{tpu_custom_call.1} parent=1 // pred_region
      _
    $region13: #{tpu_custom_call.1} parent=1 // pred_fallthru
      _
    // Predicated region
    $region14: #{tpu_custom_call.1} parent=1 // pred_check
      _
    $region15: #{tpu_custom_call.1} parent=1 // pred_check_branch
      %29 = sbr.rel (0) target = $region17
    $region16: #{tpu_custom_call.1} parent=1 // pred_region
      _
    $region17: #{tpu_custom_call.1} parent=1 // pred_fallthru
      _
    // Predicated region
    $region18: #{tpu_custom_call.1} parent=1 // pred_check
      _
    $region19: #{tpu_custom_call.1} parent=1 // pred_check_branch
      %31 = sbr.rel (0) target = $region21
    $region20: #{tpu_custom_call.1} parent=1 // pred_region
      _
    $region21: #{tpu_custom_call.1} parent=1 // pred_fallthru
      _
    // Predicated region
    $region22: #{tpu_custom_call.1} parent=1 // pred_check
      _
    $region23: #{tpu_custom_call.1} parent=1 // pred_check_branch
      %33 = sbr.rel (0) target = $region25
    $region24: #{tpu_custom_call.1} parent=1 // pred_region
      %34 = dma.done [#allocation3], 3072
    $region25: #{tpu_custom_call.1} parent=1 // pred_fallthru
      _
    %v35 = vld [vmem:[%s0] sm:$0xff]
    %v36 = vld [vmem:[#allocation2] sm:$0xff]
    %v37 = vld [vmem:[#allocation2 + $0x8] sm:$0xff]
    %v38 = vld [vmem:[#allocation2 + $0x10] sm:$0xff]
    %v39 = vld [vmem:[#allocation2 + $0x18] sm:$0xff]
    %v40 = vld [vmem:[#allocation2 + $0x20] sm:$0xff]
    %v41 = vld [vmem:[#allocation2 + $0x28] sm:$0xff]
    %v42 = vld [vmem:[#allocation2 + $0x30] sm:$0xff]
    %v43 = vld [vmem:[#allocation2 + $0x38] sm:$0xff]
    %v44 = vld [vmem:[%s2] sm:$0xff]
    %v45 = vld [vmem:[%s2 + $0x8] sm:$0xff]
    %v46 = vld [vmem:[%s2 + $0x10] sm:$0xff]
    %v47 = vld [vmem:[%s2 + $0x18] sm:$0xff]
    %v48 = vld [vmem:[%s2 + $0x20] sm:$0xff]
    %v49 = vld [vmem:[%s2 + $0x28] sm:$0xff]
    %v50 = vld [vmem:[%s2 + $0x30] sm:$0xff]
    %v51 = vld [vmem:[%s2 + $0x38] sm:$0xff]
    %53 = vset.pattern.permute.xlu0 0
    %54 = vperm.xlu0 %53, %v44
    %v55 = vpop.permute.xlu0 %54
    %58 = vset.pattern.permute.xlu0 0
    %59 = vperm.xlu0 %58, %v45
    %v60 = vpop.permute.xlu0 %59
    %63 = vset.pattern.permute.xlu0 0
    %64 = vperm.xlu0 %63, %v46
    %v65 = vpop.permute.xlu0 %64
    %68 = vset.pattern.permute.xlu0 0
    %69 = vperm.xlu0 %68, %v47
    %v70 = vpop.permute.xlu0 %69
    %73 = vset.pattern.permute.xlu0 0
    %74 = vperm.xlu0 %73, %v48
    %v75 = vpop.permute.xlu0 %74
    %78 = vset.pattern.permute.xlu0 0
    %79 = vperm.xlu0 %78, %v49
    %v80 = vpop.permute.xlu0 %79
    %83 = vset.pattern.permute.xlu0 0
    %84 = vperm.xlu0 %83, %v50
    %v85 = vpop.permute.xlu0 %84
    %88 = vset.pattern.permute.xlu0 0
    %89 = vperm.xlu0 %88, %v51
    %v90 = vpop.permute.xlu0 %89
    %vm92 = vcmask 64512
    %v94 = vsel %vm92, %v36, 0
    %v97 = vsel %vm92, %v37, 0
    %v100 = vsel %vm92, %v38, 0
    %v103 = vsel %vm92, %v39, 0
    %v106 = vsel %vm92, %v40, 0
    %v109 = vsel %vm92, %v41, 0
    %v112 = vsel %vm92, %v42, 0
    %v115 = vsel %vm92, %v43, 0
    %117 = vmatprep.subr.mxu0 0.0
    %118 = vmatpush1.msra.mxu0 %v35
    %119 = vmatprep.subr.mxu0 0.0
    %120 = vmatpush1.msra.mxu0 0.0
    %121 = vmatprep.subr.mxu0 0.0
    %122 = vmatpush1.msra.mxu0 0.0
    %123 = vmatprep.subr.mxu0 0.0
    %124 = vmatpush1.msra.mxu0 0.0
    %125 = vmatprep.subr.mxu0 0.0
    %126 = vmatpush1.msra.mxu0 0.0
    %127 = vmatprep.subr.mxu0 0.0
    %128 = vmatpush1.msra.mxu0 0.0
    %129 = vmatprep.subr.mxu0 0.0
    %130 = vmatpush1.msra.mxu0 0.0
    %131 = vmatprep.subr.mxu0 0.0
    %132 = vmatpush1.msra.mxu0 0.0
    %133 = vmatprep.subr.mxu0 0.0
    %134 = vmatpush1.msra.mxu0 0.0
    %135 = vmatprep.subr.mxu0 0.0
    %136 = vmatpush1.msra.mxu0 0.0
    %137 = vmatprep.subr.mxu0 0.0
    %138 = vmatpush1.msra.mxu0 0.0
    %139 = vmatprep.subr.mxu0 0.0
    %140 = vmatpush1.msra.mxu0 0.0
    %141 = vmatprep.subr.mxu0 0.0
    %142 = vmatpush1.msra.mxu0 0.0
    %143 = vmatprep.subr.mxu0 0.0
    %144 = vmatpush1.msra.mxu0 0.0
    %145 = vmatprep.subr.mxu0 0.0
    %146 = vmatpush1.msra.mxu0 0.0
    %147 = vmatprep.subr.mxu0 0.0
    %148 = vmatpush1.msra.mxu0 0.0
    %149 = vmatprep.subr.mxu0 0.0
    %150 = vmatpush1.msra.mxu0 0.0
    %151 = vmatprep.subr.mxu0 0.0
    %152 = vmatpush1.msra.mxu0 0.0
    %153 = vmatprep.subr.mxu0 0.0
    %154 = vmatpush1.msra.mxu0 0.0
    %155 = vmatprep.subr.mxu0 0.0
    %156 = vmatpush1.msra.mxu0 0.0
    %157 = vmatprep.subr.mxu0 0.0
    %158 = vmatpush1.msra.mxu0 0.0
    %159 = vmatprep.subr.mxu0 0.0
    %160 = vmatpush1.msra.mxu0 0.0
    %161 = vmatprep.subr.mxu0 0.0
    %162 = vmatpush1.msra.mxu0 0.0
    %163 = vmatprep.subr.mxu0 0.0
    %164 = vmatpush1.msra.mxu0 0.0
    %165 = vmatprep.subr.mxu0 0.0
    %166 = vmatpush1.msra.mxu0 0.0
    %167 = vmatprep.subr.mxu0 0.0
    %168 = vmatpush1.msra.mxu0 0.0
    %169 = vmatprep.subr.mxu0 0.0
    %170 = vmatpush1.msra.mxu0 0.0
    %171 = vmatprep.subr.mxu0 0.0
    %172 = vmatpush1.msra.mxu0 0.0
    %173 = vmatprep.subr.mxu0 0.0
    %174 = vmatpush1.msra.mxu0 0.0
    %175 = vmatprep.subr.mxu0 0.0
    %176 = vmatpush1.msra.mxu0 0.0
    %177 = vmatprep.subr.mxu0 0.0
    %178 = vmatpush1.msra.mxu0 0.0
    %179 = vmatprep.subr.mxu0 0.0
    %180 = vmatpush1.msra.mxu0 0.0
    %181 = vmatprep.mubr.f32.mxu0 0.0
    %182 = vmatmul.mubr.f32.gmra.mrb[0].mxu0 %v94
    %v183 = vpop.f32.mrb[0].mxu0
    %v184 = vadd.f32 %v55, %v183
    %v185 = vpop.f32.mrb[0].mxu0
    %186 = vmatprep.mubr.f32.mxu0 0.0
    %187 = vmatmul.mubr.f32.gmra.mrb[0].mxu0 %v97
    %v188 = vpop.f32.mrb[0].mxu0
    %v189 = vadd.f32 %v60, %v188
    %v190 = vpop.f32.mrb[0].mxu0
    %191 = vmatprep.mubr.f32.mxu0 0.0
    %192 = vmatmul.mubr.f32.gmra.mrb[0].mxu0 %v100
    %v193 = vpop.f32.mrb[0].mxu0
    %v194 = vadd.f32 %v65, %v193
    %v195 = vpop.f32.mrb[0].mxu0
    %196 = vmatprep.mubr.f32.mxu0 0.0
    %197 = vmatmul.mubr.f32.gmra.mrb[0].mxu0 %v103
    %v198 = vpop.f32.mrb[0].mxu0
    %v199 = vadd.f32 %v70, %v198
    %v200 = vpop.f32.mrb[0].mxu0
    %201 = vmatprep.mubr.f32.mxu0 0.0
    %202 = vmatmul.mubr.f32.gmra.mrb[0].mxu0 %v106
    %v203 = vpop.f32.mrb[0].mxu0
    %v204 = vadd.f32 %v75, %v203
    %v205 = vpop.f32.mrb[0].mxu0
    %206 = vmatprep.mubr.f32.mxu0 0.0
    %207 = vmatmul.mubr.f32.gmra.mrb[0].mxu0 %v109
    %v208 = vpop.f32.mrb[0].mxu0
    %v209 = vadd.f32 %v80, %v208
    %v210 = vpop.f32.mrb[0].mxu0
    %211 = vmatprep.mubr.f32.mxu0 0.0
    %212 = vmatmul.mubr.f32.gmra.mrb[0].mxu0 %v112
    %v213 = vpop.f32.mrb[0].mxu0
    %v214 = vadd.f32 %v85, %v213
    %v215 = vpop.f32.mrb[0].mxu0
    %216 = vmatprep.mubr.f32.mxu0 0.0
    %217 = vmatmul.mubr.f32.gmra.mrb[0].mxu0 %v115
    %v218 = vpop.f32.mrb[0].mxu0
    %v219 = vadd.f32 %v90, %v218
    %v220 = vpop.f32.mrb[0].mxu0
    %221 = vdwg.mxu0
    %v222 = vtanh.pop %v184
    %v223 = vtanh.pop %v189
    %v224 = vtanh.pop %v194
    %v225 = vtanh.pop %v199
    %v226 = vtanh.pop %v204
    %v227 = vtanh.pop %v209
    %v228 = vtanh.pop %v214
    %v229 = vtanh.pop %v219
    %s230 = scalar_lea.vmem [#allocation2], 64
    %v231 = vld [vmem:[%s230] sm:$0xff]
    %v232 = vld [vmem:[%s230 + $0x8] sm:$0xff]
    %v233 = vld [vmem:[%s230 + $0x10] sm:$0xff]
    %v234 = vld [vmem:[%s230 + $0x18] sm:$0xff]
    %v235 = vld [vmem:[%s230 + $0x20] sm:$0xff]
    %v236 = vld [vmem:[%s230 + $0x28] sm:$0xff]
    %v237 = vld [vmem:[%s230 + $0x30] sm:$0xff]
    %v238 = vld [vmem:[%s230 + $0x38] sm:$0xff]
    %239 = vset.pattern.permute.xlu0 1
    %240 = vperm.xlu0 %239, %v44
    %v241 = vpop.permute.xlu0 %240
    %243 = vset.pattern.permute.xlu0 1
    %244 = vperm.xlu0 %243, %v45
    %v245 = vpop.permute.xlu0 %244
    %247 = vset.pattern.permute.xlu0 1
    %248 = vperm.xlu0 %247, %v46
    %v249 = vpop.permute.xlu0 %248
    %251 = vset.pattern.permute.xlu0 1
    %252 = vperm.xlu0 %251, %v47
    %v253 = vpop.permute.xlu0 %252
    %255 = vset.pattern.permute.xlu0 1
    %256 = vperm.xlu0 %255, %v48
    %v257 = vpop.permute.xlu0 %256
    %259 = vset.pattern.permute.xlu0 1
    %260 = vperm.xlu0 %259, %v49
    %v261 = vpop.permute.xlu0 %260
    %263 = vset.pattern.permute.xlu0 1
    %264 = vperm.xlu0 %263, %v50
    %v265 = vpop.permute.xlu0 %264
    %267 = vset.pattern.permute.xlu0 1
    %268 = vperm.xlu0 %267, %v51
    %v269 = vpop.permute.xlu0 %268
    %vm271 = vcmask 523264
    %v273 = vsel %vm271, %v231, 0
    %v276 = vsel %vm271, %v232, 0
    %v279 = vsel %vm271, %v233, 0
    %v282 = vsel %vm271, %v234, 0
    %v285 = vsel %vm271, %v235, 0
    %v288 = vsel %vm271, %v236, 0
    %v291 = vsel %vm271, %v237, 0
    %v294 = vsel %vm271, %v238, 0
    %296 = vmatprep.subr.mxu0 0.0
    %297 = vmatpush1.msra.mxu0 %v222
    %298 = vmatprep.subr.mxu0 0.0
    %299 = vmatpush1.msra.mxu0 %v223
    %300 = vmatprep.subr.mxu0 0.0
    %301 = vmatpush1.msra.mxu0 %v224
    %302 = vmatprep.subr.mxu0 0.0
    %303 = vmatpush1.msra.mxu0 %v225
    %304 = vmatprep.subr.mxu0 0.0
    %305 = vmatpush1.msra.mxu0 %v226
    %306 = vmatprep.subr.mxu0 0.0
    %307 = vmatpush1.msra.mxu0 %v227
    %308 = vmatprep.subr.mxu0 0.0
    %309 = vmatpush1.msra.mxu0 %v228
    %310 = vmatprep.subr.mxu0 0.0
    %311 = vmatpush1.msra.mxu0 %v229
    %312 = vmatprep.subr.mxu0 0.0
    %313 = vmatpush1.msra.mxu0 0.0
    %314 = vmatprep.subr.mxu0 0.0
    %315 = vmatpush1.msra.mxu0 0.0
    %316 = vmatprep.subr.mxu0 0.0
    %317 = vmatpush1.msra.mxu0 0.0
    %318 = vmatprep.subr.mxu0 0.0
    %319 = vmatpush1.msra.mxu0 0.0
    %320 = vmatprep.subr.mxu0 0.0
    %321 = vmatpush1.msra.mxu0 0.0
    %322 = vmatprep.subr.mxu0 0.0
    %323 = vmatpush1.msra.mxu0 0.0
    %324 = vmatprep.subr.mxu0 0.0
    %325 = vmatpush1.msra.mxu0 0.0
    %326 = vmatprep.subr.mxu0 0.0
    %327 = vmatpush1.msra.mxu0 0.0
    %328 = vmatprep.subr.mxu0 0.0
    %329 = vmatpush1.msra.mxu0 0.0
    %330 = vmatprep.subr.mxu0 0.0
    %331 = vmatpush1.msra.mxu0 0.0
    %332 = vmatprep.subr.mxu0 0.0
    %333 = vmatpush1.msra.mxu0 0.0
    %334 = vmatprep.subr.mxu0 0.0
    %335 = vmatpush1.msra.mxu0 0.0
    %336 = vmatprep.subr.mxu0 0.0
    %337 = vmatpush1.msra.mxu0 0.0
    %338 = vmatprep.subr.mxu0 0.0
    %339 = vmatpush1.msra.mxu0 0.0
    %340 = vmatprep.subr.mxu0 0.0
    %341 = vmatpush1.msra.mxu0 0.0
    %342 = vmatprep.subr.mxu0 0.0
    %343 = vmatpush1.msra.mxu0 0.0
    %344 = vmatprep.subr.mxu0 0.0
    %345 = vmatpush1.msra.mxu0 0.0
    %346 = vmatprep.subr.mxu0 0.0
    %347 = vmatpush1.msra.mxu0 0.0
    %348 = vmatprep.subr.mxu0 0.0
    %349 = vmatpush1.msra.mxu0 0.0
    %350 = vmatprep.subr.mxu0 0.0
    %351 = vmatpush1.msra.mxu0 0.0
    %352 = vmatprep.subr.mxu0 0.0
    %353 = vmatpush1.msra.mxu0 0.0
    %354 = vmatprep.subr.mxu0 0.0
    %355 = vmatpush1.msra.mxu0 0.0
    %356 = vmatprep.subr.mxu0 0.0
    %357 = vmatpush1.msra.mxu0 0.0
    %358 = vmatprep.subr.mxu0 0.0
    %359 = vmatpush1.msra.mxu0 0.0
    %360 = vmatprep.mubr.f32.mxu0 0.0
    %361 = vmatmul.mubr.f32.gmra.mrb[0].mxu0 %v273
    %v362 = vpop.f32.mrb[0].mxu0
    %v363 = vadd.f32 %v241, %v362
    %v364 = vpop.f32.mrb[0].mxu0
    %365 = vmatprep.mubr.f32.mxu0 0.0
    %366 = vmatmul.mubr.f32.gmra.mrb[0].mxu0 %v276
    %v367 = vpop.f32.mrb[0].mxu0
    %v368 = vadd.f32 %v245, %v367
    %v369 = vpop.f32.mrb[0].mxu0
    %370 = vmatprep.mubr.f32.mxu0 0.0
    %371 = vmatmul.mubr.f32.gmra.mrb[0].mxu0 %v279
    %v372 = vpop.f32.mrb[0].mxu0
    %v373 = vadd.f32 %v249, %v372
    %v374 = vpop.f32.mrb[0].mxu0
    %375 = vmatprep.mubr.f32.mxu0 0.0
    %376 = vmatmul.mubr.f32.gmra.mrb[0].mxu0 %v282
    %v377 = vpop.f32.mrb[0].mxu0
    %v378 = vadd.f32 %v253, %v377
    %v379 = vpop.f32.mrb[0].mxu0
    %380 = vmatprep.mubr.f32.mxu0 0.0
    %381 = vmatmul.mubr.f32.gmra.mrb[0].mxu0 %v285
    %v382 = vpop.f32.mrb[0].mxu0
    %v383 = vadd.f32 %v257, %v382
    %v384 = vpop.f32.mrb[0].mxu0
    %385 = vmatprep.mubr.f32.mxu0 0.0
    %386 = vmatmul.mubr.f32.gmra.mrb[0].mxu0 %v288
    %v387 = vpop.f32.mrb[0].mxu0
    %v388 = vadd.f32 %v261, %v387
    %v389 = vpop.f32.mrb[0].mxu0
    %390 = vmatprep.mubr.f32.mxu0 0.0
    %391 = vmatmul.mubr.f32.gmra.mrb[0].mxu0 %v291
    %v392 = vpop.f32.mrb[0].mxu0
    %v393 = vadd.f32 %v265, %v392
    %v394 = vpop.f32.mrb[0].mxu0
    %395 = vmatprep.mubr.f32.mxu0 0.0
    %396 = vmatmul.mubr.f32.gmra.mrb[0].mxu0 %v294
    %v397 = vpop.f32.mrb[0].mxu0
    %v398 = vadd.f32 %v269, %v397
    %v399 = vpop.f32.mrb[0].mxu0
    %400 = vdwg.mxu0
    %v401 = vtanh.pop %v363
    %v402 = vtanh.pop %v368
    %v403 = vtanh.pop %v373
    %v404 = vtanh.pop %v378
    %v405 = vtanh.pop %v383
    %v406 = vtanh.pop %v388
    %v407 = vtanh.pop %v393
    %v408 = vtanh.pop %v398
    %s409 = scalar_lea.vmem [#allocation2], 128
    %v410 = vld [vmem:[%s409] sm:$0xff]
    %v411 = vld [vmem:[%s409 + $0x8] sm:$0xff]
    %v412 = vld [vmem:[%s409 + $0x10] sm:$0xff]
    %v413 = vld [vmem:[%s409 + $0x18] sm:$0xff]
    %v414 = vld [vmem:[%s409 + $0x20] sm:$0xff]
    %v415 = vld [vmem:[%s2] sm:$0xff]
    %v416 = vld [vmem:[%s2 + $0x8] sm:$0xff]
    %v417 = vld [vmem:[%s2 + $0x10] sm:$0xff]
    %v418 = vld [vmem:[%s2 + $0x18] sm:$0xff]
    %v419 = vld [vmem:[%s2 + $0x20] sm:$0xff]
    %421 = vset.pattern.permute.xlu0 2
    %422 = vperm.xlu0 %421, %v415
    %v423 = vpop.permute.xlu0 %422
    %426 = vset.pattern.permute.xlu0 2
    %427 = vperm.xlu0 %426, %v416
    %v428 = vpop.permute.xlu0 %427
    %431 = vset.pattern.permute.xlu0 2
    %432 = vperm.xlu0 %431, %v417
    %v433 = vpop.permute.xlu0 %432
    %436 = vset.pattern.permute.xlu0 2
    %437 = vperm.xlu0 %436, %v418
    %v438 = vpop.permute.xlu0 %437
    %441 = vset.pattern.permute.xlu0 2
    %442 = vperm.xlu0 %441, %v419
    %v443 = vpop.permute.xlu0 %442
    %v446 = vsel %vm271, %v410, 0
    %v449 = vsel %vm271, %v411, 0
    %v452 = vsel %vm271, %v412, 0
    %v455 = vsel %vm271, %v413, 0
    %v458 = vsel %vm271, %v414, 0
    %460 = vmatprep.subr.mxu0 0.0
    %461 = vmatpush1.msra.mxu0 %v401
    %462 = vmatprep.subr.mxu0 0.0
    %463 = vmatpush1.msra.mxu0 %v402
    %464 = vmatprep.subr.mxu0 0.0
    %465 = vmatpush1.msra.mxu0 %v403
    %466 = vmatprep.subr.mxu0 0.0
    %467 = vmatpush1.msra.mxu0 %v404
    %468 = vmatprep.subr.mxu0 0.0
    %469 = vmatpush1.msra.mxu0 %v405
    %470 = vmatprep.subr.mxu0 0.0
    %471 = vmatpush1.msra.mxu0 %v406
    %472 = vmatprep.subr.mxu0 0.0
    %473 = vmatpush1.msra.mxu0 %v407
    %474 = vmatprep.subr.mxu0 0.0
    %475 = vmatpush1.msra.mxu0 %v408
    %476 = vmatprep.subr.mxu0 0.0
    %477 = vmatpush1.msra.mxu0 0.0
    %478 = vmatprep.subr.mxu0 0.0
    %479 = vmatpush1.msra.mxu0 0.0
    %480 = vmatprep.subr.mxu0 0.0
    %481 = vmatpush1.msra.mxu0 0.0
    %482 = vmatprep.subr.mxu0 0.0
    %483 = vmatpush1.msra.mxu0 0.0
    %484 = vmatprep.subr.mxu0 0.0
    %485 = vmatpush1.msra.mxu0 0.0
    %486 = vmatprep.subr.mxu0 0.0
    %487 = vmatpush1.msra.mxu0 0.0
    %488 = vmatprep.subr.mxu0 0.0
    %489 = vmatpush1.msra.mxu0 0.0
    %490 = vmatprep.subr.mxu0 0.0
    %491 = vmatpush1.msra.mxu0 0.0
    %492 = vmatprep.subr.mxu0 0.0
    %493 = vmatpush1.msra.mxu0 0.0
    %494 = vmatprep.subr.mxu0 0.0
    %495 = vmatpush1.msra.mxu0 0.0
    %496 = vmatprep.subr.mxu0 0.0
    %497 = vmatpush1.msra.mxu0 0.0
    %498 = vmatprep.subr.mxu0 0.0
    %499 = vmatpush1.msra.mxu0 0.0
    %500 = vmatprep.subr.mxu0 0.0
    %501 = vmatpush1.msra.mxu0 0.0
    %502 = vmatprep.subr.mxu0 0.0
    %503 = vmatpush1.msra.mxu0 0.0
    %504 = vmatprep.subr.mxu0 0.0
    %505 = vmatpush1.msra.mxu0 0.0
    %506 = vmatprep.subr.mxu0 0.0
    %507 = vmatpush1.msra.mxu0 0.0
    %508 = vmatprep.subr.mxu0 0.0
    %509 = vmatpush1.msra.mxu0 0.0
    %510 = vmatprep.subr.mxu0 0.0
    %511 = vmatpush1.msra.mxu0 0.0
    %512 = vmatprep.subr.mxu0 0.0
    %513 = vmatpush1.msra.mxu0 0.0
    %514 = vmatprep.subr.mxu0 0.0
    %515 = vmatpush1.msra.mxu0 0.0
    %516 = vmatprep.subr.mxu0 0.0
    %517 = vmatpush1.msra.mxu0 0.0
    %518 = vmatprep.subr.mxu0 0.0
    %519 = vmatpush1.msra.mxu0 0.0
    %520 = vmatprep.subr.mxu0 0.0
    %521 = vmatpush1.msra.mxu0 0.0
    %522 = vmatprep.subr.mxu0 0.0
    %523 = vmatpush1.msra.mxu0 0.0
    %524 = vmatprep.mubr.f32.mxu0 0.0
    %525 = vmatmul.mubr.f32.gmra.mrb[0].mxu0 %v446
    %v526 = vpop.f32.mrb[0].mxu0
    %v527 = vadd.f32 %v423, %v526
    %v528 = vpop.f32.mrb[0].mxu0
    %529 = vmatprep.mubr.f32.mxu0 0.0
    %530 = vmatmul.mubr.f32.gmra.mrb[0].mxu0 %v449
    %v531 = vpop.f32.mrb[0].mxu0
    %v532 = vadd.f32 %v428, %v531
    %v533 = vpop.f32.mrb[0].mxu0
    %534 = vmatprep.mubr.f32.mxu0 0.0
    %535 = vmatmul.mubr.f32.gmra.mrb[0].mxu0 %v452
    %v536 = vpop.f32.mrb[0].mxu0
    %v537 = vadd.f32 %v433, %v536
    %v538 = vpop.f32.mrb[0].mxu0
    %539 = vmatprep.mubr.f32.mxu0 0.0
    %540 = vmatmul.mubr.f32.gmra.mrb[0].mxu0 %v455
    %v541 = vpop.f32.mrb[0].mxu0
    %v542 = vadd.f32 %v438, %v541
    %v543 = vpop.f32.mrb[0].mxu0
    %544 = vmatprep.mubr.f32.mxu0 0.0
    %545 = vmatmul.mubr.f32.gmra.mrb[0].mxu0 %v458
    %v546 = vpop.f32.mrb[0].mxu0
    %v547 = vadd.f32 %v443, %v546
    %v548 = vpop.f32.mrb[0].mxu0
    %549 = vdwg.mxu0
    %v550 = vld [vmem:[%s2] sm:$0xff]
    %v551 = vmax.f32 %v527, 0.0
    %553 = vset.pattern.permute.xlu0 3
    %554 = vperm.xlu0 %553, %v550
    %v555 = vpop.permute.xlu0 %554
    %v557 = vadd.f32 %v551, %v555
    %v558 = vmul.f32 %v557, %v35
    %v559 = vld [vmem:[%s3] sm:$0xff]
    %v560 = vld [vmem:[%s3 + $0x8] sm:$0xff]
    %v561 = vld [vmem:[%s3 + $0x10] sm:$0xff]
    %v562 = vld [vmem:[%s3 + $0x18] sm:$0xf]
    %v564 = vsel %vm92, %v559, 0
    %v567 = vsel %vm92, %v560, 0
    %v570 = vsel %vm92, %v561, 0
    %v573 = vsel %vm92, %v562, 0
    %575 = vmatprep.subr.mxu0 0.0
    %576 = vmatpush1.msra.mxu0 %v35
    %577 = vmatprep.subr.mxu0 0.0
    %578 = vmatpush1.msra.mxu0 0.0
    %579 = vmatprep.subr.mxu0 0.0
    %580 = vmatpush1.msra.mxu0 0.0
    %581 = vmatprep.subr.mxu0 0.0
    %582 = vmatpush1.msra.mxu0 0.0
    %583 = vmatprep.subr.mxu0 0.0
    %584 = vmatpush1.msra.mxu0 0.0
    %585 = vmatprep.subr.mxu0 0.0
    %586 = vmatpush1.msra.mxu0 0.0
    %587 = vmatprep.subr.mxu0 0.0
    %588 = vmatpush1.msra.mxu0 0.0
    %589 = vmatprep.subr.mxu0 0.0
    %590 = vmatpush1.msra.mxu0 0.0
    %591 = vmatprep.subr.mxu0 0.0
    %592 = vmatpush1.msra.mxu0 0.0
    %593 = vmatprep.subr.mxu0 0.0
    %594 = vmatpush1.msra.mxu0 0.0
    %595 = vmatprep.subr.mxu0 0.0
    %596 = vmatpush1.msra.mxu0 0.0
    %597 = vmatprep.subr.mxu0 0.0
    %598 = vmatpush1.msra.mxu0 0.0
    %599 = vmatprep.subr.mxu0 0.0
    %600 = vmatpush1.msra.mxu0 0.0
    %601 = vmatprep.subr.mxu0 0.0
    %602 = vmatpush1.msra.mxu0 0.0
    %603 = vmatprep.subr.mxu0 0.0
    %604 = vmatpush1.msra.mxu0 0.0
    %605 = vmatprep.subr.mxu0 0.0
    %606 = vmatpush1.msra.mxu0 0.0
    %607 = vmatprep.subr.mxu0 0.0
    %608 = vmatpush1.msra.mxu0 0.0
    %609 = vmatprep.subr.mxu0 0.0
    %610 = vmatpush1.msra.mxu0 0.0
    %611 = vmatprep.subr.mxu0 0.0
    %612 = vmatpush1.msra.mxu0 0.0
    %613 = vmatprep.subr.mxu0 0.0
    %614 = vmatpush1.msra.mxu0 0.0
    %615 = vmatprep.subr.mxu0 0.0
    %616 = vmatpush1.msra.mxu0 0.0
    %617 = vmatprep.subr.mxu0 0.0
    %618 = vmatpush1.msra.mxu0 0.0
    %619 = vmatprep.subr.mxu0 0.0
    %620 = vmatpush1.msra.mxu0 0.0
    %621 = vmatprep.subr.mxu0 0.0
    %622 = vmatpush1.msra.mxu0 0.0
    %623 = vmatprep.subr.mxu0 0.0
    %624 = vmatpush1.msra.mxu0 0.0
    %625 = vmatprep.subr.mxu0 0.0
    %626 = vmatpush1.msra.mxu0 0.0
    %627 = vmatprep.subr.mxu0 0.0
    %628 = vmatpush1.msra.mxu0 0.0
    %629 = vmatprep.subr.mxu0 0.0
    %630 = vmatpush1.msra.mxu0 0.0
    %631 = vmatprep.subr.mxu0 0.0
    %632 = vmatpush1.msra.mxu0 0.0
    %633 = vmatprep.subr.mxu0 0.0
    %634 = vmatpush1.msra.mxu0 0.0
    %635 = vmatprep.subr.mxu0 0.0
    %636 = vmatpush1.msra.mxu0 0.0
    %637 = vmatprep.subr.mxu0 0.0
    %638 = vmatpush1.msra.mxu0 0.0
    %639 = vmatprep.mubr.f32.mxu0 0.0
    %640 = vmatmul.mubr.f32.gmra.mrb[0].mxu0 %v564
    %v641 = vpop.f32.mrb[0].mxu0
    %v642 = vadd.f32 0.0, %v641
    %v643 = vpop.f32.mrb[0].mxu0
    %644 = vmatprep.mubr.f32.mxu0 0.0
    %645 = vmatmul.mubr.f32.gmra.mrb[0].mxu0 %v567
    %v646 = vpop.f32.mrb[0].mxu0
    %v647 = vadd.f32 0.0, %v646
    %v648 = vpop.f32.mrb[0].mxu0
    %649 = vmatprep.mubr.f32.mxu0 0.0
    %650 = vmatmul.mubr.f32.gmra.mrb[0].mxu0 %v570
    %v651 = vpop.f32.mrb[0].mxu0
    %v652 = vadd.f32 0.0, %v651
    %v653 = vpop.f32.mrb[0].mxu0
    %654 = vmatprep.mubr.f32.mxu0 0.0
    %655 = vmatmul.mubr.f32.gmra.mrb[0].mxu0 %v573
    %v656 = vpop.f32.mrb[0].mxu0
    %v657 = vadd.f32 0.0, %v656
    %v658 = vpop.f32.mrb[0].mxu0
    %659 = vdwg.mxu0
    %v660 = vld [vmem:[%s4] sm:$0xff]
    %v661 = vmul.f32 %v532, %v642
    %v662 = vmul.f32 %v537, %v647
    %v663 = vmul.f32 %v542, %v652
    %v664 = vmul.f32 %v547, %v657
    %v665 = vmul.f32 %v558, %v35
    %vm666 = vcmask 228352
    %v668 = vsel %vm666, %v660, 0
    %vm670 = vcmask 1043456
    %v672 = vsel %vm670, %v664, 0
    %674 = vmatprep.subr.mxu0 0.0
    %675 = vmatpush1.msra.mxu0 %v661
    %676 = vmatprep.subr.mxu0 0.0
    %677 = vmatpush1.msra.mxu0 %v662
    %678 = vmatprep.subr.mxu0 0.0
    %679 = vmatpush1.msra.mxu0 %v663
    %680 = vmatprep.subr.mxu0 0.0
    %681 = vmatpush1.msra.mxu0 %v672
    %682 = vmatprep.subr.mxu0 0.0
    %683 = vmatpush1.msra.mxu0 0.0
    %684 = vmatprep.subr.mxu0 0.0
    %685 = vmatpush1.msra.mxu0 0.0
    %686 = vmatprep.subr.mxu0 0.0
    %687 = vmatpush1.msra.mxu0 0.0
    %688 = vmatprep.subr.mxu0 0.0
    %689 = vmatpush1.msra.mxu0 0.0
    %690 = vmatprep.subr.mxu0 0.0
    %691 = vmatpush1.msra.mxu0 0.0
    %692 = vmatprep.subr.mxu0 0.0
    %693 = vmatpush1.msra.mxu0 0.0
    %694 = vmatprep.subr.mxu0 0.0
    %695 = vmatpush1.msra.mxu0 0.0
    %696 = vmatprep.subr.mxu0 0.0
    %697 = vmatpush1.msra.mxu0 0.0
    %698 = vmatprep.subr.mxu0 0.0
    %699 = vmatpush1.msra.mxu0 0.0
    %700 = vmatprep.subr.mxu0 0.0
    %701 = vmatpush1.msra.mxu0 0.0
    %702 = vmatprep.subr.mxu0 0.0
    %703 = vmatpush1.msra.mxu0 0.0
    %704 = vmatprep.subr.mxu0 0.0
    %705 = vmatpush1.msra.mxu0 0.0
    %706 = vmatprep.subr.mxu0 0.0
    %707 = vmatpush1.msra.mxu0 0.0
    %708 = vmatprep.subr.mxu0 0.0
    %709 = vmatpush1.msra.mxu0 0.0
    %710 = vmatprep.subr.mxu0 0.0
    %711 = vmatpush1.msra.mxu0 0.0
    %712 = vmatprep.subr.mxu0 0.0
    %713 = vmatpush1.msra.mxu0 0.0
    %714 = vmatprep.subr.mxu0 0.0
    %715 = vmatpush1.msra.mxu0 0.0
    %716 = vmatprep.subr.mxu0 0.0
    %717 = vmatpush1.msra.mxu0 0.0
    %718 = vmatprep.subr.mxu0 0.0
    %719 = vmatpush1.msra.mxu0 0.0
    %720 = vmatprep.subr.mxu0 0.0
    %721 = vmatpush1.msra.mxu0 0.0
    %722 = vmatprep.subr.mxu0 0.0
    %723 = vmatpush1.msra.mxu0 0.0
    %724 = vmatprep.subr.mxu0 0.0
    %725 = vmatpush1.msra.mxu0 0.0
    %726 = vmatprep.subr.mxu0 0.0
    %727 = vmatpush1.msra.mxu0 0.0
    %728 = vmatprep.subr.mxu0 0.0
    %729 = vmatpush1.msra.mxu0 0.0
    %730 = vmatprep.subr.mxu0 0.0
    %731 = vmatpush1.msra.mxu0 0.0
    %732 = vmatprep.subr.mxu0 0.0
    %733 = vmatpush1.msra.mxu0 0.0
    %734 = vmatprep.subr.mxu0 0.0
    %735 = vmatpush1.msra.mxu0 0.0
    %736 = vmatprep.subr.mxu0 0.0
    %737 = vmatpush1.msra.mxu0 0.0
    %738 = vmatprep.mubr.f32.mxu0 0.0
    %739 = vmatmul.mubr.f32.gmra.mrb[0].mxu0 %v668
    %v740 = vpop.f32.mrb[0].mxu0
    %v741 = vadd.f32 %v665, %v740
    %v742 = vpop.f32.mrb[0].mxu0
    %743 = vdwg.mxu0
    %s744 = scalar_lea.vmem %s3, 32
    %v745 = vld [vmem:[%s744] sm:$0xff]
    %v746 = vld [vmem:[%s744 + $0x8] sm:$0xff]
    %v747 = vld [vmem:[%s744 + $0x10] sm:$0xff]
    %v748 = vld [vmem:[%s744 + $0x18] sm:$0xf]
    %v750 = vsel %vm92, %v745, 0
    %v753 = vsel %vm92, %v746, 0
    %v756 = vsel %vm92, %v747, 0
    %v759 = vsel %vm92, %v748, 0
    %761 = vmatprep.subr.mxu0 0.0
    %762 = vmatpush1.msra.mxu0 %v741
    %763 = vmatprep.subr.mxu0 0.0
    %764 = vmatpush1.msra.mxu0 0.0
    %765 = vmatprep.subr.mxu0 0.0
    %766 = vmatpush1.msra.mxu0 0.0
    %767 = vmatprep.subr.mxu0 0.0
    %768 = vmatpush1.msra.mxu0 0.0
    %769 = vmatprep.subr.mxu0 0.0
    %770 = vmatpush1.msra.mxu0 0.0
    %771 = vmatprep.subr.mxu0 0.0
    %772 = vmatpush1.msra.mxu0 0.0
    %773 = vmatprep.subr.mxu0 0.0
    %774 = vmatpush1.msra.mxu0 0.0
    %775 = vmatprep.subr.mxu0 0.0
    %776 = vmatpush1.msra.mxu0 0.0
    %777 = vmatprep.subr.mxu0 0.0
    %778 = vmatpush1.msra.mxu0 0.0
    %779 = vmatprep.subr.mxu0 0.0
    %780 = vmatpush1.msra.mxu0 0.0
    %781 = vmatprep.subr.mxu0 0.0
    %782 = vmatpush1.msra.mxu0 0.0
    %783 = vmatprep.subr.mxu0 0.0
    %784 = vmatpush1.msra.mxu0 0.0
    %785 = vmatprep.subr.mxu0 0.0
    %786 = vmatpush1.msra.mxu0 0.0
    %787 = vmatprep.subr.mxu0 0.0
    %788 = vmatpush1.msra.mxu0 0.0
    %789 = vmatprep.subr.mxu0 0.0
    %790 = vmatpush1.msra.mxu0 0.0
    %791 = vmatprep.subr.mxu0 0.0
    %792 = vmatpush1.msra.mxu0 0.0
    %793 = vmatprep.subr.mxu0 0.0
    %794 = vmatpush1.msra.mxu0 0.0
    %795 = vmatprep.subr.mxu0 0.0
    %796 = vmatpush1.msra.mxu0 0.0
    %797 = vmatprep.subr.mxu0 0.0
    %798 = vmatpush1.msra.mxu0 0.0
    %799 = vmatprep.subr.mxu0 0.0
    %800 = vmatpush1.msra.mxu0 0.0
    %801 = vmatprep.subr.mxu0 0.0
    %802 = vmatpush1.msra.mxu0 0.0
    %803 = vmatprep.subr.mxu0 0.0
    %804 = vmatpush1.msra.mxu0 0.0
    %805 = vmatprep.subr.mxu0 0.0
    %806 = vmatpush1.msra.mxu0 0.0
    %807 = vmatprep.subr.mxu0 0.0
    %808 = vmatpush1.msra.mxu0 0.0
    %809 = vmatprep.subr.mxu0 0.0
    %810 = vmatpush1.msra.mxu0 0.0
    %811 = vmatprep.subr.mxu0 0.0
    %812 = vmatpush1.msra.mxu0 0.0
    %813 = vmatprep.subr.mxu0 0.0
    %814 = vmatpush1.msra.mxu0 0.0
    %815 = vmatprep.subr.mxu0 0.0
    %816 = vmatpush1.msra.mxu0 0.0
    %817 = vmatprep.subr.mxu0 0.0
    %818 = vmatpush1.msra.mxu0 0.0
    %819 = vmatprep.subr.mxu0 0.0
    %820 = vmatpush1.msra.mxu0 0.0
    %821 = vmatprep.subr.mxu0 0.0
    %822 = vmatpush1.msra.mxu0 0.0
    %823 = vmatprep.subr.mxu0 0.0
    %824 = vmatpush1.msra.mxu0 0.0
    %825 = vmatprep.mubr.f32.mxu0 0.0
    %826 = vmatmul.mubr.f32.gmra.mrb[0].mxu0 %v750
    %v827 = vpop.f32.mrb[0].mxu0
    %v828 = vadd.f32 0.0, %v827
    %v829 = vpop.f32.mrb[0].mxu0
    %830 = vmatprep.mubr.f32.mxu0 0.0
    %831 = vmatmul.mubr.f32.gmra.mrb[0].mxu0 %v753
    %v832 = vpop.f32.mrb[0].mxu0
    %v833 = vadd.f32 0.0, %v832
    %v834 = vpop.f32.mrb[0].mxu0
    %835 = vmatprep.mubr.f32.mxu0 0.0
    %836 = vmatmul.mubr.f32.gmra.mrb[0].mxu0 %v756
    %v837 = vpop.f32.mrb[0].mxu0
    %v838 = vadd.f32 0.0, %v837
    %v839 = vpop.f32.mrb[0].mxu0
    %840 = vmatprep.mubr.f32.mxu0 0.0
    %841 = vmatmul.mubr.f32.gmra.mrb[0].mxu0 %v759
    %v842 = vpop.f32.mrb[0].mxu0
    %v843 = vadd.f32 0.0, %v842
    %v844 = vpop.f32.mrb[0].mxu0
    %845 = vdwg.mxu0
    %s846 = scalar_lea.vmem %s4, 8
    %v847 = vld [vmem:[%s846] sm:$0xff]
    %v848 = vmul.f32 %v532, %v828
    %v849 = vmul.f32 %v537, %v833
    %v850 = vmul.f32 %v542, %v838
    %v851 = vmul.f32 %v547, %v843
    %v852 = vmul.f32 %v558, %v741
    %v854 = vsel %vm666, %v847, 0
    %v857 = vsel %vm670, %v851, 0
    %859 = vmatprep.subr.mxu0 0.0
    %860 = vmatpush1.msra.mxu0 %v848
    %861 = vmatprep.subr.mxu0 0.0
    %862 = vmatpush1.msra.mxu0 %v849
    %863 = vmatprep.subr.mxu0 0.0
    %864 = vmatpush1.msra.mxu0 %v850
    %865 = vmatprep.subr.mxu0 0.0
    %866 = vmatpush1.msra.mxu0 %v857
    %867 = vmatprep.subr.mxu0 0.0
    %868 = vmatpush1.msra.mxu0 0.0
    %869 = vmatprep.subr.mxu0 0.0
    %870 = vmatpush1.msra.mxu0 0.0
    %871 = vmatprep.subr.mxu0 0.0
    %872 = vmatpush1.msra.mxu0 0.0
    %873 = vmatprep.subr.mxu0 0.0
    %874 = vmatpush1.msra.mxu0 0.0
    %875 = vmatprep.subr.mxu0 0.0
    %876 = vmatpush1.msra.mxu0 0.0
    %877 = vmatprep.subr.mxu0 0.0
    %878 = vmatpush1.msra.mxu0 0.0
    %879 = vmatprep.subr.mxu0 0.0
    %880 = vmatpush1.msra.mxu0 0.0
    %881 = vmatprep.subr.mxu0 0.0
    %882 = vmatpush1.msra.mxu0 0.0
    %883 = vmatprep.subr.mxu0 0.0
    %884 = vmatpush1.msra.mxu0 0.0
    %885 = vmatprep.subr.mxu0 0.0
    %886 = vmatpush1.msra.mxu0 0.0
    %887 = vmatprep.subr.mxu0 0.0
    %888 = vmatpush1.msra.mxu0 0.0
    %889 = vmatprep.subr.mxu0 0.0
    %890 = vmatpush1.msra.mxu0 0.0
    %891 = vmatprep.subr.mxu0 0.0
    %892 = vmatpush1.msra.mxu0 0.0
    %893 = vmatprep.subr.mxu0 0.0
    %894 = vmatpush1.msra.mxu0 0.0
    %895 = vmatprep.subr.mxu0 0.0
    %896 = vmatpush1.msra.mxu0 0.0
    %897 = vmatprep.subr.mxu0 0.0
    %898 = vmatpush1.msra.mxu0 0.0
    %899 = vmatprep.subr.mxu0 0.0
    %900 = vmatpush1.msra.mxu0 0.0
    %901 = vmatprep.subr.mxu0 0.0
    %902 = vmatpush1.msra.mxu0 0.0
    %903 = vmatprep.subr.mxu0 0.0
    %904 = vmatpush1.msra.mxu0 0.0
    %905 = vmatprep.subr.mxu0 0.0
    %906 = vmatpush1.msra.mxu0 0.0
    %907 = vmatprep.subr.mxu0 0.0
    %908 = vmatpush1.msra.mxu0 0.0
    %909 = vmatprep.subr.mxu0 0.0
    %910 = vmatpush1.msra.mxu0 0.0
    %911 = vmatprep.subr.mxu0 0.0
    %912 = vmatpush1.msra.mxu0 0.0
    %913 = vmatprep.subr.mxu0 0.0
    %914 = vmatpush1.msra.mxu0 0.0
    %915 = vmatprep.subr.mxu0 0.0
    %916 = vmatpush1.msra.mxu0 0.0
    %917 = vmatprep.subr.mxu0 0.0
    %918 = vmatpush1.msra.mxu0 0.0
    %919 = vmatprep.subr.mxu0 0.0
    %920 = vmatpush1.msra.mxu0 0.0
    %921 = vmatprep.subr.mxu0 0.0
    %922 = vmatpush1.msra.mxu0 0.0
    %923 = vmatprep.mubr.f32.mxu0 0.0
    %924 = vmatmul.mubr.f32.gmra.mrb[0].mxu0 %v854
    %v925 = vpop.f32.mrb[0].mxu0
    %v926 = vadd.f32 %v852, %v925
    %v927 = vpop.f32.mrb[0].mxu0
    %928 = vdwg.mxu0
    %929 = vst [vmem:[#allocation5] sm:$0xff] %v926
    // Predicated region
    $region26: #{tpu_custom_call.1} parent=1 // pred_check
      _
    $region27: #{tpu_custom_call.1} parent=1 // pred_check_branch
      %931 = sbr.rel (0) target = $region29
    $region28: #{tpu_custom_call.1} parent=1 // pred_region
      %s933 = ssub.s32 128, 128
      %934 = vsyncadd [#allocation4], %s933
      %s936 = sshll.u32 [#allocation5], 4
      %s937 = int_to_ptr.vmem [resolvable:$true] %s936
      %939 = dma.vmem_to_hbm [thread:$0]  %s937, 128, %s5, [#allocation4]
    $region29: #{tpu_custom_call.1} parent=1 // pred_fallthru
      _
    // Predicated region
    $region30: #{tpu_custom_call.1} parent=1 // pred_check
      _
    $region31: #{tpu_custom_call.1} parent=1 // pred_check_branch
      %941 = sbr.rel (0) target = $region33
    $region32: #{tpu_custom_call.1} parent=1 // pred_region
      %942 = dma.done [#allocation4], 128
    $region33: #{tpu_custom_call.1} parent=1 // pred_fallthru
      _
    %943 = vsyncpa [#allocation3], 1
    %944 = vsyncpa [#allocation4], 1

// kernel: tpu_custom_call.1
$region0: #{tpu_custom_call.1}
  #allocation0 [shape = 'u32[]', space=smem, size = 0x4, offset = 0x4, fixed_abs, tag = 'smem constant byte address 0x4 - core index']
  #allocation1 [shape = 'u32[144,128]{1,0:T(1,128)}', space=vmem, size = 0x12000, scoped, tag = 'internal scratch']
  %s0 = inlined_call_operand.vmem [shape: f32[8,128], index: 0, kind: input, shape index: {}]
  %s1 = inlined_call_operand.hbm [shape: f32[3,64,64], index: 1, kind: input, shape index: {}]
  %s2 = inlined_call_operand.vmem [shape: f32[64,4], index: 2, kind: input, shape index: {}]
  %s3 = inlined_call_operand.vmem [shape: f32[2,28,8], index: 3, kind: input, shape index: {}]
  %s4 = inlined_call_operand.vmem [shape: f32[2,8,28], index: 4, kind: input, shape index: {}]
  %s5 = inlined_call_operand.hbm [shape: f32[8,128], index: 5, kind: output, shape index: {}]
  %s6 = sld [smem:[#allocation0]]
  $region34: #{tpu_custom_call.1} parent=0
    _
  %s8 = ssub.s32 1, %s6
  %s9 = scalar_select 0, %s8, %s6
  $region1: #{tpu_custom_call.1} parent=0
    #allocation2 [shape = 'u8[98304]{0}', space=vmem, size = 0x18000, scoped, tag = 'input window, operand 1, single buffered']
    #allocation3 [shape = 's32[1]{0}', space=sflag, size = 0x4, scoped, tag = 'scoped memory for tpu_custom_call.1']
    #allocation4 [shape = 's32[1]{0}', space=sflag, size = 0x4, scoped, tag = 'scoped memory for tpu_custom_call.1']
    #allocation5 [shape = 'u8[4096]{0}', space=vmem, size = 0x1000, scoped, tag = 'output window, operand 0, single buffered']
    %10 = vsyncpa [#allocation3], 0
    %11 = vsyncpa [#allocation4], 0
    // Predicated region
    $region2: #{tpu_custom_call.1} parent=1 // pred_check
      _
    $region3: #{tpu_custom_call.1} parent=1 // pred_check_branch
      %13 = sbr.rel (0) target = $region5
    $region4: #{tpu_custom_call.1} parent=1 // pred_region
      _
    $region5: #{tpu_custom_call.1} parent=1 // pred_fallthru
      _
    // Predicated region
    $region6: #{tpu_custom_call.1} parent=1 // pred_check
      _
    $region7: #{tpu_custom_call.1} parent=1 // pred_check_branch
      %15 = sbr.rel (0) target = $region9
    $region8: #{tpu_custom_call.1} parent=1 // pred_region
      %s17 = ssub.s32 3072, 3072
      %18 = vsyncadd [#allocation3], %s17
      %s19 = sshll.u32 [#allocation2], 4
      %s20 = int_to_ptr.vmem [resolvable:$true] %s19
      %25 = dma.hbm_to_vmem [thread:$0]  %s1, 3072, %s20, [#allocation3], 128, 128, 8
    $region9: #{tpu_custom_call.1} parent=1 // pred_fallthru
      _
    // Predicated region
    $region10: #{tpu_custom_call.1} parent=1 // pred_check
      _
    $region11: #{tpu_custom_call.1} parent=1 // pred_check_branch
      %27 = sbr.rel (0) target = $region13
    $region12: #{tpu_custom_call.1} parent=1 // pred_region
      _
    $region13: #{tpu_custom_call.1} parent=1 // pred_fallthru
      _
    // Predicated region
    $region14: #{tpu_custom_call.1} parent=1 // pred_check
      _
    $region15: #{tpu_custom_call.1} parent=1 // pred_check_branch
      %29 = sbr.rel (0) target = $region17
    $region16: #{tpu_custom_call.1} parent=1 // pred_region
      _
    $region17: #{tpu_custom_call.1} parent=1 // pred_fallthru
      _
    // Predicated region
    $region18: #{tpu_custom_call.1} parent=1 // pred_check
      _
    $region19: #{tpu_custom_call.1} parent=1 // pred_check_branch
      %31 = sbr.rel (0) target = $region21
    $region20: #{tpu_custom_call.1} parent=1 // pred_region
      _
    $region21: #{tpu_custom_call.1} parent=1 // pred_fallthru
      _
    // Predicated region
    $region22: #{tpu_custom_call.1} parent=1 // pred_check
      _
    $region23: #{tpu_custom_call.1} parent=1 // pred_check_branch
      %33 = sbr.rel (0) target = $region25
    $region24: #{tpu_custom_call.1} parent=1 // pred_region
      %34 = dma.done [#allocation3], 3072
    $region25: #{tpu_custom_call.1} parent=1 // pred_fallthru
      _
    %v35 = vld [vmem:[%s0] sm:$0xff]
    %v36 = vld [vmem:[#allocation2] sm:$0xff]
    %v37 = vld [vmem:[#allocation2 + $0x8] sm:$0xff]
    %v38 = vld [vmem:[#allocation2 + $0x10] sm:$0xff]
    %v39 = vld [vmem:[#allocation2 + $0x18] sm:$0xff]
    %v40 = vld [vmem:[#allocation2 + $0x20] sm:$0xff]
    %v41 = vld [vmem:[#allocation2 + $0x28] sm:$0xff]
    %v42 = vld [vmem:[#allocation2 + $0x30] sm:$0xff]
    %v43 = vld [vmem:[#allocation2 + $0x38] sm:$0xff]
    %v44 = vld [vmem:[%s2] sm:$0xff]
    %v45 = vld [vmem:[%s2 + $0x8] sm:$0xff]
    %v46 = vld [vmem:[%s2 + $0x10] sm:$0xff]
    %v47 = vld [vmem:[%s2 + $0x18] sm:$0xff]
    %v48 = vld [vmem:[%s2 + $0x20] sm:$0xff]
    %v49 = vld [vmem:[%s2 + $0x28] sm:$0xff]
    %v50 = vld [vmem:[%s2 + $0x30] sm:$0xff]
    %v51 = vld [vmem:[%s2 + $0x38] sm:$0xff]
    %53 = vset.pattern.permute.xlu0 0
    %54 = vperm.xlu0 %53, %v44
    %v55 = vpop.permute.xlu0 %54
    %58 = vset.pattern.permute.xlu0 0
    %59 = vperm.xlu0 %58, %v45
    %v60 = vpop.permute.xlu0 %59
    %63 = vset.pattern.permute.xlu0 0
    %64 = vperm.xlu0 %63, %v46
    %v65 = vpop.permute.xlu0 %64
    %68 = vset.pattern.permute.xlu0 0
    %69 = vperm.xlu0 %68, %v47
    %v70 = vpop.permute.xlu0 %69
    %73 = vset.pattern.permute.xlu0 0
    %74 = vperm.xlu0 %73, %v48
    %v75 = vpop.permute.xlu0 %74
    %78 = vset.pattern.permute.xlu0 0
    %79 = vperm.xlu0 %78, %v49
    %v80 = vpop.permute.xlu0 %79
    %83 = vset.pattern.permute.xlu0 0
    %84 = vperm.xlu0 %83, %v50
    %v85 = vpop.permute.xlu0 %84
    %88 = vset.pattern.permute.xlu0 0
    %89 = vperm.xlu0 %88, %v51
    %v90 = vpop.permute.xlu0 %89
    %vm92 = vcmask 64512
    %v94 = vsel %vm92, %v36, 0
    %v97 = vsel %vm92, %v37, 0
    %v100 = vsel %vm92, %v38, 0
    %v103 = vsel %vm92, %v39, 0
    %v106 = vsel %vm92, %v40, 0
    %v109 = vsel %vm92, %v41, 0
    %v112 = vsel %vm92, %v42, 0
    %v115 = vsel %vm92, %v43, 0
    %117 = vmatprep.subr.mxu0 0.0
    %118 = vmatpush1.msra.mxu0 %v35
    %119 = vmatprep.subr.mxu0 0.0
    %120 = vmatpush1.msra.mxu0 0.0
    %121 = vmatprep.subr.mxu0 0.0
    %122 = vmatpush1.msra.mxu0 0.0
    %123 = vmatprep.subr.mxu0 0.0
    %124 = vmatpush1.msra.mxu0 0.0
    %125 = vmatprep.subr.mxu0 0.0
    %126 = vmatpush1.msra.mxu0 0.0
    %127 = vmatprep.subr.mxu0 0.0
    %128 = vmatpush1.msra.mxu0 0.0
    %129 = vmatprep.subr.mxu0 0.0
    %130 = vmatpush1.msra.mxu0 0.0
    %131 = vmatprep.subr.mxu0 0.0
    %132 = vmatpush1.msra.mxu0 0.0
    %133 = vmatprep.subr.mxu0 0.0
    %134 = vmatpush1.msra.mxu0 0.0
    %135 = vmatprep.subr.mxu0 0.0
    %136 = vmatpush1.msra.mxu0 0.0
    %137 = vmatprep.subr.mxu0 0.0
    %138 = vmatpush1.msra.mxu0 0.0
    %139 = vmatprep.subr.mxu0 0.0
    %140 = vmatpush1.msra.mxu0 0.0
    %141 = vmatprep.subr.mxu0 0.0
    %142 = vmatpush1.msra.mxu0 0.0
    %143 = vmatprep.subr.mxu0 0.0
    %144 = vmatpush1.msra.mxu0 0.0
    %145 = vmatprep.subr.mxu0 0.0
    %146 = vmatpush1.msra.mxu0 0.0
    %147 = vmatprep.subr.mxu0 0.0
    %148 = vmatpush1.msra.mxu0 0.0
    %149 = vmatprep.subr.mxu0 0.0
    %150 = vmatpush1.msra.mxu0 0.0
    %151 = vmatprep.subr.mxu0 0.0
    %152 = vmatpush1.msra.mxu0 0.0
    %153 = vmatprep.subr.mxu0 0.0
    %154 = vmatpush1.msra.mxu0 0.0
    %155 = vmatprep.subr.mxu0 0.0
    %156 = vmatpush1.msra.mxu0 0.0
    %157 = vmatprep.subr.mxu0 0.0
    %158 = vmatpush1.msra.mxu0 0.0
    %159 = vmatprep.subr.mxu0 0.0
    %160 = vmatpush1.msra.mxu0 0.0
    %161 = vmatprep.subr.mxu0 0.0
    %162 = vmatpush1.msra.mxu0 0.0
    %163 = vmatprep.subr.mxu0 0.0
    %164 = vmatpush1.msra.mxu0 0.0
    %165 = vmatprep.subr.mxu0 0.0
    %166 = vmatpush1.msra.mxu0 0.0
    %167 = vmatprep.subr.mxu0 0.0
    %168 = vmatpush1.msra.mxu0 0.0
    %169 = vmatprep.subr.mxu0 0.0
    %170 = vmatpush1.msra.mxu0 0.0
    %171 = vmatprep.subr.mxu0 0.0
    %172 = vmatpush1.msra.mxu0 0.0
    %173 = vmatprep.subr.mxu0 0.0
    %174 = vmatpush1.msra.mxu0 0.0
    %175 = vmatprep.subr.mxu0 0.0
    %176 = vmatpush1.msra.mxu0 0.0
    %177 = vmatprep.subr.mxu0 0.0
    %178 = vmatpush1.msra.mxu0 0.0
    %179 = vmatprep.subr.mxu0 0.0
    %180 = vmatpush1.msra.mxu0 0.0
    %181 = vmatprep.mubr.f32.mxu0 0.0
    %182 = vmatmul.mubr.f32.gmra.mrb[0].mxu0 %v94
    %v183 = vpop.f32.mrb[0].mxu0
    %v184 = vadd.f32 %v55, %v183
    %v185 = vpop.f32.mrb[0].mxu0
    %186 = vmatprep.mubr.f32.mxu0 0.0
    %187 = vmatmul.mubr.f32.gmra.mrb[0].mxu0 %v97
    %v188 = vpop.f32.mrb[0].mxu0
    %v189 = vadd.f32 %v60, %v188
    %v190 = vpop.f32.mrb[0].mxu0
    %191 = vmatprep.mubr.f32.mxu0 0.0
    %192 = vmatmul.mubr.f32.gmra.mrb[0].mxu0 %v100
    %v193 = vpop.f32.mrb[0].mxu0
    %v194 = vadd.f32 %v65, %v193
    %v195 = vpop.f32.mrb[0].mxu0
    %196 = vmatprep.mubr.f32.mxu0 0.0
    %197 = vmatmul.mubr.f32.gmra.mrb[0].mxu0 %v103
    %v198 = vpop.f32.mrb[0].mxu0
    %v199 = vadd.f32 %v70, %v198
    %v200 = vpop.f32.mrb[0].mxu0
    %201 = vmatprep.mubr.f32.mxu0 0.0
    %202 = vmatmul.mubr.f32.gmra.mrb[0].mxu0 %v106
    %v203 = vpop.f32.mrb[0].mxu0
    %v204 = vadd.f32 %v75, %v203
    %v205 = vpop.f32.mrb[0].mxu0
    %206 = vmatprep.mubr.f32.mxu0 0.0
    %207 = vmatmul.mubr.f32.gmra.mrb[0].mxu0 %v109
    %v208 = vpop.f32.mrb[0].mxu0
    %v209 = vadd.f32 %v80, %v208
    %v210 = vpop.f32.mrb[0].mxu0
    %211 = vmatprep.mubr.f32.mxu0 0.0
    %212 = vmatmul.mubr.f32.gmra.mrb[0].mxu0 %v112
    %v213 = vpop.f32.mrb[0].mxu0
    %v214 = vadd.f32 %v85, %v213
    %v215 = vpop.f32.mrb[0].mxu0
    %216 = vmatprep.mubr.f32.mxu0 0.0
    %217 = vmatmul.mubr.f32.gmra.mrb[0].mxu0 %v115
    %v218 = vpop.f32.mrb[0].mxu0
    %v219 = vadd.f32 %v90, %v218
    %v220 = vpop.f32.mrb[0].mxu0
    %221 = vdwg.mxu0
    %v222 = vtanh.pop %v184
    %v223 = vtanh.pop %v189
    %v224 = vtanh.pop %v194
    %v225 = vtanh.pop %v199
    %v226 = vtanh.pop %v204
    %v227 = vtanh.pop %v209
    %v228 = vtanh.pop %v214
    %v229 = vtanh.pop %v219
    %s230 = scalar_lea.vmem [#allocation2], 64
    %v231 = vld [vmem:[%s230] sm:$0xff]
    %v232 = vld [vmem:[%s230 + $0x8] sm:$0xff]
    %v233 = vld [vmem:[%s230 + $0x10] sm:$0xff]
    %v234 = vld [vmem:[%s230 + $0x18] sm:$0xff]
    %v235 = vld [vmem:[%s230 + $0x20] sm:$0xff]
    %v236 = vld [vmem:[%s230 + $0x28] sm:$0xff]
    %v237 = vld [vmem:[%s230 + $0x30] sm:$0xff]
    %v238 = vld [vmem:[%s230 + $0x38] sm:$0xff]
    %239 = vset.pattern.permute.xlu0 1
    %240 = vperm.xlu0 %239, %v44
    %v241 = vpop.permute.xlu0 %240
    %243 = vset.pattern.permute.xlu0 1
    %244 = vperm.xlu0 %243, %v45
    %v245 = vpop.permute.xlu0 %244
    %247 = vset.pattern.permute.xlu0 1
    %248 = vperm.xlu0 %247, %v46
    %v249 = vpop.permute.xlu0 %248
    %251 = vset.pattern.permute.xlu0 1
    %252 = vperm.xlu0 %251, %v47
    %v253 = vpop.permute.xlu0 %252
    %255 = vset.pattern.permute.xlu0 1
    %256 = vperm.xlu0 %255, %v48
    %v257 = vpop.permute.xlu0 %256
    %259 = vset.pattern.permute.xlu0 1
    %260 = vperm.xlu0 %259, %v49
    %v261 = vpop.permute.xlu0 %260
    %263 = vset.pattern.permute.xlu0 1
    %264 = vperm.xlu0 %263, %v50
    %v265 = vpop.permute.xlu0 %264
    %267 = vset.pattern.permute.xlu0 1
    %268 = vperm.xlu0 %267, %v51
    %v269 = vpop.permute.xlu0 %268
    %vm271 = vcmask 523264
    %v273 = vsel %vm271, %v231, 0
    %v276 = vsel %vm271, %v232, 0
    %v279 = vsel %vm271, %v233, 0
    %v282 = vsel %vm271, %v234, 0
    %v285 = vsel %vm271, %v235, 0
    %v288 = vsel %vm271, %v236, 0
    %v291 = vsel %vm271, %v237, 0
    %v294 = vsel %vm271, %v238, 0
    %296 = vmatprep.subr.mxu0 0.0
    %297 = vmatpush1.msra.mxu0 %v222
    %298 = vmatprep.subr.mxu0 0.0
    %299 = vmatpush1.msra.mxu0 %v223
    %300 = vmatprep.subr.mxu0 0.0
    %301 = vmatpush1.msra.mxu0 %v224
    %302 = vmatprep.subr.mxu0 0.0
    %303 = vmatpush1.msra.mxu0 %v225
    %304 = vmatprep.subr.mxu0 0.0
    %305 = vmatpush1.msra.mxu0 %v226
    %306 = vmatprep.subr.mxu0 0.0
    %307 = vmatpush1.msra.mxu0 %v227
    %308 = vmatprep.subr.mxu0 0.0
    %309 = vmatpush1.msra.mxu0 %v228
    %310 = vmatprep.subr.mxu0 0.0
    %311 = vmatpush1.msra.mxu0 %v229
    %312 = vmatprep.subr.mxu0 0.0
    %313 = vmatpush1.msra.mxu0 0.0
    %314 = vmatprep.subr.mxu0 0.0
    %315 = vmatpush1.msra.mxu0 0.0
    %316 = vmatprep.subr.mxu0 0.0
    %317 = vmatpush1.msra.mxu0 0.0
    %318 = vmatprep.subr.mxu0 0.0
    %319 = vmatpush1.msra.mxu0 0.0
    %320 = vmatprep.subr.mxu0 0.0
    %321 = vmatpush1.msra.mxu0 0.0
    %322 = vmatprep.subr.mxu0 0.0
    %323 = vmatpush1.msra.mxu0 0.0
    %324 = vmatprep.subr.mxu0 0.0
    %325 = vmatpush1.msra.mxu0 0.0
    %326 = vmatprep.subr.mxu0 0.0
    %327 = vmatpush1.msra.mxu0 0.0
    %328 = vmatprep.subr.mxu0 0.0
    %329 = vmatpush1.msra.mxu0 0.0
    %330 = vmatprep.subr.mxu0 0.0
    %331 = vmatpush1.msra.mxu0 0.0
    %332 = vmatprep.subr.mxu0 0.0
    %333 = vmatpush1.msra.mxu0 0.0
    %334 = vmatprep.subr.mxu0 0.0
    %335 = vmatpush1.msra.mxu0 0.0
    %336 = vmatprep.subr.mxu0 0.0
    %337 = vmatpush1.msra.mxu0 0.0
    %338 = vmatprep.subr.mxu0 0.0
    %339 = vmatpush1.msra.mxu0 0.0
    %340 = vmatprep.subr.mxu0 0.0
    %341 = vmatpush1.msra.mxu0 0.0
    %342 = vmatprep.subr.mxu0 0.0
    %343 = vmatpush1.msra.mxu0 0.0
    %344 = vmatprep.subr.mxu0 0.0
    %345 = vmatpush1.msra.mxu0 0.0
    %346 = vmatprep.subr.mxu0 0.0
    %347 = vmatpush1.msra.mxu0 0.0
    %348 = vmatprep.subr.mxu0 0.0
    %349 = vmatpush1.msra.mxu0 0.0
    %350 = vmatprep.subr.mxu0 0.0
    %351 = vmatpush1.msra.mxu0 0.0
    %352 = vmatprep.subr.mxu0 0.0
    %353 = vmatpush1.msra.mxu0 0.0
    %354 = vmatprep.subr.mxu0 0.0
    %355 = vmatpush1.msra.mxu0 0.0
    %356 = vmatprep.subr.mxu0 0.0
    %357 = vmatpush1.msra.mxu0 0.0
    %358 = vmatprep.subr.mxu0 0.0
    %359 = vmatpush1.msra.mxu0 0.0
    %360 = vmatprep.mubr.f32.mxu0 0.0
    %361 = vmatmul.mubr.f32.gmra.mrb[0].mxu0 %v273
    %v362 = vpop.f32.mrb[0].mxu0
    %v363 = vadd.f32 %v241, %v362
    %v364 = vpop.f32.mrb[0].mxu0
    %365 = vmatprep.mubr.f32.mxu0 0.0
    %366 = vmatmul.mubr.f32.gmra.mrb[0].mxu0 %v276
    %v367 = vpop.f32.mrb[0].mxu0
    %v368 = vadd.f32 %v245, %v367
    %v369 = vpop.f32.mrb[0].mxu0
    %370 = vmatprep.mubr.f32.mxu0 0.0
    %371 = vmatmul.mubr.f32.gmra.mrb[0].mxu0 %v279
    %v372 = vpop.f32.mrb[0].mxu0
    %v373 = vadd.f32 %v249, %v372
    %v374 = vpop.f32.mrb[0].mxu0
    %375 = vmatprep.mubr.f32.mxu0 0.0
    %376 = vmatmul.mubr.f32.gmra.mrb[0].mxu0 %v282
    %v377 = vpop.f32.mrb[0].mxu0
    %v378 = vadd.f32 %v253, %v377
    %v379 = vpop.f32.mrb[0].mxu0
    %380 = vmatprep.mubr.f32.mxu0 0.0
    %381 = vmatmul.mubr.f32.gmra.mrb[0].mxu0 %v285
    %v382 = vpop.f32.mrb[0].mxu0
    %v383 = vadd.f32 %v257, %v382
    %v384 = vpop.f32.mrb[0].mxu0
    %385 = vmatprep.mubr.f32.mxu0 0.0
    %386 = vmatmul.mubr.f32.gmra.mrb[0].mxu0 %v288
    %v387 = vpop.f32.mrb[0].mxu0
    %v388 = vadd.f32 %v261, %v387
    %v389 = vpop.f32.mrb[0].mxu0
    %390 = vmatprep.mubr.f32.mxu0 0.0
    %391 = vmatmul.mubr.f32.gmra.mrb[0].mxu0 %v291
    %v392 = vpop.f32.mrb[0].mxu0
    %v393 = vadd.f32 %v265, %v392
    %v394 = vpop.f32.mrb[0].mxu0
    %395 = vmatprep.mubr.f32.mxu0 0.0
    %396 = vmatmul.mubr.f32.gmra.mrb[0].mxu0 %v294
    %v397 = vpop.f32.mrb[0].mxu0
    %v398 = vadd.f32 %v269, %v397
    %v399 = vpop.f32.mrb[0].mxu0
    %400 = vdwg.mxu0
    %v401 = vtanh.pop %v363
    %v402 = vtanh.pop %v368
    %v403 = vtanh.pop %v373
    %v404 = vtanh.pop %v378
    %v405 = vtanh.pop %v383
    %v406 = vtanh.pop %v388
    %v407 = vtanh.pop %v393
    %v408 = vtanh.pop %v398
    %s409 = scalar_lea.vmem [#allocation2], 128
    %v410 = vld [vmem:[%s409] sm:$0xff]
    %v411 = vld [vmem:[%s409 + $0x8] sm:$0xff]
    %v412 = vld [vmem:[%s409 + $0x10] sm:$0xff]
    %v413 = vld [vmem:[%s409 + $0x18] sm:$0xff]
    %v414 = vld [vmem:[%s409 + $0x20] sm:$0xff]
    %v415 = vld [vmem:[%s2] sm:$0xff]
    %v416 = vld [vmem:[%s2 + $0x8] sm:$0xff]
    %v417 = vld [vmem:[%s2 + $0x10] sm:$0xff]
    %v418 = vld [vmem:[%s2 + $0x18] sm:$0xff]
    %v419 = vld [vmem:[%s2 + $0x20] sm:$0xff]
    %421 = vset.pattern.permute.xlu0 2
    %422 = vperm.xlu0 %421, %v415
    %v423 = vpop.permute.xlu0 %422
    %426 = vset.pattern.permute.xlu0 2
    %427 = vperm.xlu0 %426, %v416
    %v428 = vpop.permute.xlu0 %427
    %431 = vset.pattern.permute.xlu0 2
    %432 = vperm.xlu0 %431, %v417
    %v433 = vpop.permute.xlu0 %432
    %436 = vset.pattern.permute.xlu0 2
    %437 = vperm.xlu0 %436, %v418
    %v438 = vpop.permute.xlu0 %437
    %441 = vset.pattern.permute.xlu0 2
    %442 = vperm.xlu0 %441, %v419
    %v443 = vpop.permute.xlu0 %442
    %v446 = vsel %vm271, %v410, 0
    %v449 = vsel %vm271, %v411, 0
    %v452 = vsel %vm271, %v412, 0
    %v455 = vsel %vm271, %v413, 0
    %v458 = vsel %vm271, %v414, 0
    %460 = vmatprep.subr.mxu0 0.0
    %461 = vmatpush1.msra.mxu0 %v401
    %462 = vmatprep.subr.mxu0 0.0
    %463 = vmatpush1.msra.mxu0 %v402
    %464 = vmatprep.subr.mxu0 0.0
    %465 = vmatpush1.msra.mxu0 %v403
    %466 = vmatprep.subr.mxu0 0.0
    %467 = vmatpush1.msra.mxu0 %v404
    %468 = vmatprep.subr.mxu0 0.0
    %469 = vmatpush1.msra.mxu0 %v405
    %470 = vmatprep.subr.mxu0 0.0
    %471 = vmatpush1.msra.mxu0 %v406
    %472 = vmatprep.subr.mxu0 0.0
    %473 = vmatpush1.msra.mxu0 %v407
    %474 = vmatprep.subr.mxu0 0.0
    %475 = vmatpush1.msra.mxu0 %v408
    %476 = vmatprep.subr.mxu0 0.0
    %477 = vmatpush1.msra.mxu0 0.0
    %478 = vmatprep.subr.mxu0 0.0
    %479 = vmatpush1.msra.mxu0 0.0
    %480 = vmatprep.subr.mxu0 0.0
    %481 = vmatpush1.msra.mxu0 0.0
    %482 = vmatprep.subr.mxu0 0.0
    %483 = vmatpush1.msra.mxu0 0.0
    %484 = vmatprep.subr.mxu0 0.0
    %485 = vmatpush1.msra.mxu0 0.0
    %486 = vmatprep.subr.mxu0 0.0
    %487 = vmatpush1.msra.mxu0 0.0
    %488 = vmatprep.subr.mxu0 0.0
    %489 = vmatpush1.msra.mxu0 0.0
    %490 = vmatprep.subr.mxu0 0.0
    %491 = vmatpush1.msra.mxu0 0.0
    %492 = vmatprep.subr.mxu0 0.0
    %493 = vmatpush1.msra.mxu0 0.0
    %494 = vmatprep.subr.mxu0 0.0
    %495 = vmatpush1.msra.mxu0 0.0
    %496 = vmatprep.subr.mxu0 0.0
    %497 = vmatpush1.msra.mxu0 0.0
    %498 = vmatprep.subr.mxu0 0.0
    %499 = vmatpush1.msra.mxu0 0.0
    %500 = vmatprep.subr.mxu0 0.0
    %501 = vmatpush1.msra.mxu0 0.0
    %502 = vmatprep.subr.mxu0 0.0
    %503 = vmatpush1.msra.mxu0 0.0
    %504 = vmatprep.subr.mxu0 0.0
    %505 = vmatpush1.msra.mxu0 0.0
    %506 = vmatprep.subr.mxu0 0.0
    %507 = vmatpush1.msra.mxu0 0.0
    %508 = vmatprep.subr.mxu0 0.0
    %509 = vmatpush1.msra.mxu0 0.0
    %510 = vmatprep.subr.mxu0 0.0
    %511 = vmatpush1.msra.mxu0 0.0
    %512 = vmatprep.subr.mxu0 0.0
    %513 = vmatpush1.msra.mxu0 0.0
    %514 = vmatprep.subr.mxu0 0.0
    %515 = vmatpush1.msra.mxu0 0.0
    %516 = vmatprep.subr.mxu0 0.0
    %517 = vmatpush1.msra.mxu0 0.0
    %518 = vmatprep.subr.mxu0 0.0
    %519 = vmatpush1.msra.mxu0 0.0
    %520 = vmatprep.subr.mxu0 0.0
    %521 = vmatpush1.msra.mxu0 0.0
    %522 = vmatprep.subr.mxu0 0.0
    %523 = vmatpush1.msra.mxu0 0.0
    %524 = vmatprep.mubr.f32.mxu0 0.0
    %525 = vmatmul.mubr.f32.gmra.mrb[0].mxu0 %v446
    %v526 = vpop.f32.mrb[0].mxu0
    %v527 = vadd.f32 %v423, %v526
    %v528 = vpop.f32.mrb[0].mxu0
    %529 = vmatprep.mubr.f32.mxu0 0.0
    %530 = vmatmul.mubr.f32.gmra.mrb[0].mxu0 %v449
    %v531 = vpop.f32.mrb[0].mxu0
    %v532 = vadd.f32 %v428, %v531
    %v533 = vpop.f32.mrb[0].mxu0
    %534 = vmatprep.mubr.f32.mxu0 0.0
    %535 = vmatmul.mubr.f32.gmra.mrb[0].mxu0 %v452
    %v536 = vpop.f32.mrb[0].mxu0
    %v537 = vadd.f32 %v433, %v536
    %v538 = vpop.f32.mrb[0].mxu0
    %539 = vmatprep.mubr.f32.mxu0 0.0
    %540 = vmatmul.mubr.f32.gmra.mrb[0].mxu0 %v455
    %v541 = vpop.f32.mrb[0].mxu0
    %v542 = vadd.f32 %v438, %v541
    %v543 = vpop.f32.mrb[0].mxu0
    %544 = vmatprep.mubr.f32.mxu0 0.0
    %545 = vmatmul.mubr.f32.gmra.mrb[0].mxu0 %v458
    %v546 = vpop.f32.mrb[0].mxu0
    %v547 = vadd.f32 %v443, %v546
    %v548 = vpop.f32.mrb[0].mxu0
    %549 = vdwg.mxu0
    %v550 = vld [vmem:[%s2] sm:$0xff]
    %v551 = vmax.f32 %v527, 0.0
    %553 = vset.pattern.permute.xlu0 3
    %554 = vperm.xlu0 %553, %v550
    %v555 = vpop.permute.xlu0 %554
    %v557 = vadd.f32 %v551, %v555
    %v558 = vmul.f32 %v557, %v35
    %v559 = vld [vmem:[%s3] sm:$0xff]
    %v560 = vld [vmem:[%s3 + $0x8] sm:$0xff]
    %v561 = vld [vmem:[%s3 + $0x10] sm:$0xff]
    %v562 = vld [vmem:[%s3 + $0x18] sm:$0xf]
    %v564 = vsel %vm92, %v559, 0
    %v567 = vsel %vm92, %v560, 0
    %v570 = vsel %vm92, %v561, 0
    %v573 = vsel %vm92, %v562, 0
    %575 = vmatprep.subr.mxu0 0.0
    %576 = vmatpush1.msra.mxu0 %v35
    %577 = vmatprep.subr.mxu0 0.0
    %578 = vmatpush1.msra.mxu0 0.0
    %579 = vmatprep.subr.mxu0 0.0
    %580 = vmatpush1.msra.mxu0 0.0
    %581 = vmatprep.subr.mxu0 0.0
    %582 = vmatpush1.msra.mxu0 0.0
    %583 = vmatprep.subr.mxu0 0.0
    %584 = vmatpush1.msra.mxu0 0.0
    %585 = vmatprep.subr.mxu0 0.0
    %586 = vmatpush1.msra.mxu0 0.0
    %587 = vmatprep.subr.mxu0 0.0
    %588 = vmatpush1.msra.mxu0 0.0
    %589 = vmatprep.subr.mxu0 0.0
    %590 = vmatpush1.msra.mxu0 0.0
    %591 = vmatprep.subr.mxu0 0.0
    %592 = vmatpush1.msra.mxu0 0.0
    %593 = vmatprep.subr.mxu0 0.0
    %594 = vmatpush1.msra.mxu0 0.0
    %595 = vmatprep.subr.mxu0 0.0
    %596 = vmatpush1.msra.mxu0 0.0
    %597 = vmatprep.subr.mxu0 0.0
    %598 = vmatpush1.msra.mxu0 0.0
    %599 = vmatprep.subr.mxu0 0.0
    %600 = vmatpush1.msra.mxu0 0.0
    %601 = vmatprep.subr.mxu0 0.0
    %602 = vmatpush1.msra.mxu0 0.0
    %603 = vmatprep.subr.mxu0 0.0
    %604 = vmatpush1.msra.mxu0 0.0
    %605 = vmatprep.subr.mxu0 0.0
    %606 = vmatpush1.msra.mxu0 0.0
    %607 = vmatprep.subr.mxu0 0.0
    %608 = vmatpush1.msra.mxu0 0.0
    %609 = vmatprep.subr.mxu0 0.0
    %610 = vmatpush1.msra.mxu0 0.0
    %611 = vmatprep.subr.mxu0 0.0
    %612 = vmatpush1.msra.mxu0 0.0
    %613 = vmatprep.subr.mxu0 0.0
    %614 = vmatpush1.msra.mxu0 0.0
    %615 = vmatprep.subr.mxu0 0.0
    %616 = vmatpush1.msra.mxu0 0.0
    %617 = vmatprep.subr.mxu0 0.0
    %618 = vmatpush1.msra.mxu0 0.0
    %619 = vmatprep.subr.mxu0 0.0
    %620 = vmatpush1.msra.mxu0 0.0
    %621 = vmatprep.subr.mxu0 0.0
    %622 = vmatpush1.msra.mxu0 0.0
    %623 = vmatprep.subr.mxu0 0.0
    %624 = vmatpush1.msra.mxu0 0.0
    %625 = vmatprep.subr.mxu0 0.0
    %626 = vmatpush1.msra.mxu0 0.0
    %627 = vmatprep.subr.mxu0 0.0
    %628 = vmatpush1.msra.mxu0 0.0
    %629 = vmatprep.subr.mxu0 0.0
    %630 = vmatpush1.msra.mxu0 0.0
    %631 = vmatprep.subr.mxu0 0.0
    %632 = vmatpush1.msra.mxu0 0.0
    %633 = vmatprep.subr.mxu0 0.0
    %634 = vmatpush1.msra.mxu0 0.0
    %635 = vmatprep.subr.mxu0 0.0
    %636 = vmatpush1.msra.mxu0 0.0
    %637 = vmatprep.subr.mxu0 0.0
    %638 = vmatpush1.msra.mxu0 0.0
    %639 = vmatprep.mubr.f32.mxu0 0.0
    %640 = vmatmul.mubr.f32.gmra.mrb[0].mxu0 %v564
    %v641 = vpop.f32.mrb[0].mxu0
    %v642 = vadd.f32 0.0, %v641
    %v643 = vpop.f32.mrb[0].mxu0
    %644 = vmatprep.mubr.f32.mxu0 0.0
    %645 = vmatmul.mubr.f32.gmra.mrb[0].mxu0 %v567
    %v646 = vpop.f32.mrb[0].mxu0
    %v647 = vadd.f32 0.0, %v646
    %v648 = vpop.f32.mrb[0].mxu0
    %649 = vmatprep.mubr.f32.mxu0 0.0
    %650 = vmatmul.mubr.f32.gmra.mrb[0].mxu0 %v570
    %v651 = vpop.f32.mrb[0].mxu0
    %v652 = vadd.f32 0.0, %v651
    %v653 = vpop.f32.mrb[0].mxu0
    %654 = vmatprep.mubr.f32.mxu0 0.0
    %655 = vmatmul.mubr.f32.gmra.mrb[0].mxu0 %v573
    %v656 = vpop.f32.mrb[0].mxu0
    %v657 = vadd.f32 0.0, %v656
    %v658 = vpop.f32.mrb[0].mxu0
    %659 = vdwg.mxu0
    %v660 = vld [vmem:[%s4] sm:$0xff]
    %v661 = vmul.f32 %v532, %v642
    %v662 = vmul.f32 %v537, %v647
    %v663 = vmul.f32 %v542, %v652
    %v664 = vmul.f32 %v547, %v657
    %v665 = vmul.f32 %v558, %v35
    %vm666 = vcmask 228352
    %v668 = vsel %vm666, %v660, 0
    %vm670 = vcmask 1043456
    %v672 = vsel %vm670, %v664, 0
    %674 = vmatprep.subr.mxu0 0.0
    %675 = vmatpush1.msra.mxu0 %v661
    %676 = vmatprep.subr.mxu0 0.0
    %677 = vmatpush1.msra.mxu0 %v662
    %678 = vmatprep.subr.mxu0 0.0
    %679 = vmatpush1.msra.mxu0 %v663
    %680 = vmatprep.subr.mxu0 0.0
    %681 = vmatpush1.msra.mxu0 %v672
    %682 = vmatprep.subr.mxu0 0.0
    %683 = vmatpush1.msra.mxu0 0.0
    %684 = vmatprep.subr.mxu0 0.0
    %685 = vmatpush1.msra.mxu0 0.0
    %686 = vmatprep.subr.mxu0 0.0
    %687 = vmatpush1.msra.mxu0 0.0
    %688 = vmatprep.subr.mxu0 0.0
    %689 = vmatpush1.msra.mxu0 0.0
    %690 = vmatprep.subr.mxu0 0.0
    %691 = vmatpush1.msra.mxu0 0.0
    %692 = vmatprep.subr.mxu0 0.0
    %693 = vmatpush1.msra.mxu0 0.0
    %694 = vmatprep.subr.mxu0 0.0
    %695 = vmatpush1.msra.mxu0 0.0
    %696 = vmatprep.subr.mxu0 0.0
    %697 = vmatpush1.msra.mxu0 0.0
    %698 = vmatprep.subr.mxu0 0.0
    %699 = vmatpush1.msra.mxu0 0.0
    %700 = vmatprep.subr.mxu0 0.0
    %701 = vmatpush1.msra.mxu0 0.0
    %702 = vmatprep.subr.mxu0 0.0
    %703 = vmatpush1.msra.mxu0 0.0
    %704 = vmatprep.subr.mxu0 0.0
    %705 = vmatpush1.msra.mxu0 0.0
    %706 = vmatprep.subr.mxu0 0.0
    %707 = vmatpush1.msra.mxu0 0.0
    %708 = vmatprep.subr.mxu0 0.0
    %709 = vmatpush1.msra.mxu0 0.0
    %710 = vmatprep.subr.mxu0 0.0
    %711 = vmatpush1.msra.mxu0 0.0
    %712 = vmatprep.subr.mxu0 0.0
    %713 = vmatpush1.msra.mxu0 0.0
    %714 = vmatprep.subr.mxu0 0.0
    %715 = vmatpush1.msra.mxu0 0.0
    %716 = vmatprep.subr.mxu0 0.0
    %717 = vmatpush1.msra.mxu0 0.0
    %718 = vmatprep.subr.mxu0 0.0
    %719 = vmatpush1.msra.mxu0 0.0
    %720 = vmatprep.subr.mxu0 0.0
    %721 = vmatpush1.msra.mxu0 0.0
    %722 = vmatprep.subr.mxu0 0.0
    %723 = vmatpush1.msra.mxu0 0.0
    %724 = vmatprep.subr.mxu0 0.0
    %725 = vmatpush1.msra.mxu0 0.0
    %726 = vmatprep.subr.mxu0 0.0
    %727 = vmatpush1.msra.mxu0 0.0
    %728 = vmatprep.subr.mxu0 0.0
    %729 = vmatpush1.msra.mxu0 0.0
    %730 = vmatprep.subr.mxu0 0.0
    %731 = vmatpush1.msra.mxu0 0.0
    %732 = vmatprep.subr.mxu0 0.0
    %733 = vmatpush1.msra.mxu0 0.0
    %734 = vmatprep.subr.mxu0 0.0
    %735 = vmatpush1.msra.mxu0 0.0
    %736 = vmatprep.subr.mxu0 0.0
    %737 = vmatpush1.msra.mxu0 0.0
    %738 = vmatprep.mubr.f32.mxu0 0.0
    %739 = vmatmul.mubr.f32.gmra.mrb[0].mxu0 %v668
    %v740 = vpop.f32.mrb[0].mxu0
    %v741 = vadd.f32 %v665, %v740
    %v742 = vpop.f32.mrb[0].mxu0
    %743 = vdwg.mxu0
    %s744 = scalar_lea.vmem %s3, 32
    %v745 = vld [vmem:[%s744] sm:$0xff]
    %v746 = vld [vmem:[%s744 + $0x8] sm:$0xff]
    %v747 = vld [vmem:[%s744 + $0x10] sm:$0xff]
    %v748 = vld [vmem:[%s744 + $0x18] sm:$0xf]
    %v750 = vsel %vm92, %v745, 0
    %v753 = vsel %vm92, %v746, 0
    %v756 = vsel %vm92, %v747, 0
    %v759 = vsel %vm92, %v748, 0
    %761 = vmatprep.subr.mxu0 0.0
    %762 = vmatpush1.msra.mxu0 %v741
    %763 = vmatprep.subr.mxu0 0.0
    %764 = vmatpush1.msra.mxu0 0.0
    %765 = vmatprep.subr.mxu0 0.0
    %766 = vmatpush1.msra.mxu0 0.0
    %767 = vmatprep.subr.mxu0 0.0
    %768 = vmatpush1.msra.mxu0 0.0
    %769 = vmatprep.subr.mxu0 0.0
    %770 = vmatpush1.msra.mxu0 0.0
    %771 = vmatprep.subr.mxu0 0.0
    %772 = vmatpush1.msra.mxu0 0.0
    %773 = vmatprep.subr.mxu0 0.0
    %774 = vmatpush1.msra.mxu0 0.0
    %775 = vmatprep.subr.mxu0 0.0
    %776 = vmatpush1.msra.mxu0 0.0
    %777 = vmatprep.subr.mxu0 0.0
    %778 = vmatpush1.msra.mxu0 0.0
    %779 = vmatprep.subr.mxu0 0.0
    %780 = vmatpush1.msra.mxu0 0.0
    %781 = vmatprep.subr.mxu0 0.0
    %782 = vmatpush1.msra.mxu0 0.0
    %783 = vmatprep.subr.mxu0 0.0
    %784 = vmatpush1.msra.mxu0 0.0
    %785 = vmatprep.subr.mxu0 0.0
    %786 = vmatpush1.msra.mxu0 0.0
    %787 = vmatprep.subr.mxu0 0.0
    %788 = vmatpush1.msra.mxu0 0.0
    %789 = vmatprep.subr.mxu0 0.0
    %790 = vmatpush1.msra.mxu0 0.0
    %791 = vmatprep.subr.mxu0 0.0
    %792 = vmatpush1.msra.mxu0 0.0
    %793 = vmatprep.subr.mxu0 0.0
    %794 = vmatpush1.msra.mxu0 0.0
    %795 = vmatprep.subr.mxu0 0.0
    %796 = vmatpush1.msra.mxu0 0.0
    %797 = vmatprep.subr.mxu0 0.0
    %798 = vmatpush1.msra.mxu0 0.0
    %799 = vmatprep.subr.mxu0 0.0
    %800 = vmatpush1.msra.mxu0 0.0
    %801 = vmatprep.subr.mxu0 0.0
    %802 = vmatpush1.msra.mxu0 0.0
    %803 = vmatprep.subr.mxu0 0.0
    %804 = vmatpush1.msra.mxu0 0.0
    %805 = vmatprep.subr.mxu0 0.0
    %806 = vmatpush1.msra.mxu0 0.0
    %807 = vmatprep.subr.mxu0 0.0
    %808 = vmatpush1.msra.mxu0 0.0
    %809 = vmatprep.subr.mxu0 0.0
    %810 = vmatpush1.msra.mxu0 0.0
    %811 = vmatprep.subr.mxu0 0.0
    %812 = vmatpush1.msra.mxu0 0.0
    %813 = vmatprep.subr.mxu0 0.0
    %814 = vmatpush1.msra.mxu0 0.0
    %815 = vmatprep.subr.mxu0 0.0
    %816 = vmatpush1.msra.mxu0 0.0
    %817 = vmatprep.subr.mxu0 0.0
    %818 = vmatpush1.msra.mxu0 0.0
    %819 = vmatprep.subr.mxu0 0.0
    %820 = vmatpush1.msra.mxu0 0.0
    %821 = vmatprep.subr.mxu0 0.0
    %822 = vmatpush1.msra.mxu0 0.0
    %823 = vmatprep.subr.mxu0 0.0
    %824 = vmatpush1.msra.mxu0 0.0
    %825 = vmatprep.mubr.f32.mxu0 0.0
    %826 = vmatmul.mubr.f32.gmra.mrb[0].mxu0 %v750
    %v827 = vpop.f32.mrb[0].mxu0
    %v828 = vadd.f32 0.0, %v827
    %v829 = vpop.f32.mrb[0].mxu0
    %830 = vmatprep.mubr.f32.mxu0 0.0
    %831 = vmatmul.mubr.f32.gmra.mrb[0].mxu0 %v753
    %v832 = vpop.f32.mrb[0].mxu0
    %v833 = vadd.f32 0.0, %v832
    %v834 = vpop.f32.mrb[0].mxu0
    %835 = vmatprep.mubr.f32.mxu0 0.0
    %836 = vmatmul.mubr.f32.gmra.mrb[0].mxu0 %v756
    %v837 = vpop.f32.mrb[0].mxu0
    %v838 = vadd.f32 0.0, %v837
    %v839 = vpop.f32.mrb[0].mxu0
    %840 = vmatprep.mubr.f32.mxu0 0.0
    %841 = vmatmul.mubr.f32.gmra.mrb[0].mxu0 %v759
    %v842 = vpop.f32.mrb[0].mxu0
    %v843 = vadd.f32 0.0, %v842
    %v844 = vpop.f32.mrb[0].mxu0
    %845 = vdwg.mxu0
    %s846 = scalar_lea.vmem %s4, 8
    %v847 = vld [vmem:[%s846] sm:$0xff]
    %v848 = vmul.f32 %v532, %v828
    %v849 = vmul.f32 %v537, %v833
    %v850 = vmul.f32 %v542, %v838
    %v851 = vmul.f32 %v547, %v843
    %v852 = vmul.f32 %v558, %v741
    %v854 = vsel %vm666, %v847, 0
    %v857 = vsel %vm670, %v851, 0
    %859 = vmatprep.subr.mxu0 0.0
    %860 = vmatpush1.msra.mxu0 %v848
    %861 = vmatprep.subr.mxu0 0.0
    %862 = vmatpush1.msra.mxu0 %v849
    %863 = vmatprep.subr.mxu0 0.0
    %864 = vmatpush1.msra.mxu0 %v850
    %865 = vmatprep.subr.mxu0 0.0
    %866 = vmatpush1.msra.mxu0 %v857
    %867 = vmatprep.subr.mxu0 0.0
    %868 = vmatpush1.msra.mxu0 0.0
    %869 = vmatprep.subr.mxu0 0.0
    %870 = vmatpush1.msra.mxu0 0.0
    %871 = vmatprep.subr.mxu0 0.0
    %872 = vmatpush1.msra.mxu0 0.0
    %873 = vmatprep.subr.mxu0 0.0
    %874 = vmatpush1.msra.mxu0 0.0
    %875 = vmatprep.subr.mxu0 0.0
    %876 = vmatpush1.msra.mxu0 0.0
    %877 = vmatprep.subr.mxu0 0.0
    %878 = vmatpush1.msra.mxu0 0.0
    %879 = vmatprep.subr.mxu0 0.0
    %880 = vmatpush1.msra.mxu0 0.0
    %881 = vmatprep.subr.mxu0 0.0
    %882 = vmatpush1.msra.mxu0 0.0
    %883 = vmatprep.subr.mxu0 0.0
    %884 = vmatpush1.msra.mxu0 0.0
    %885 = vmatprep.subr.mxu0 0.0
    %886 = vmatpush1.msra.mxu0 0.0
    %887 = vmatprep.subr.mxu0 0.0
    %888 = vmatpush1.msra.mxu0 0.0
    %889 = vmatprep.subr.mxu0 0.0
    %890 = vmatpush1.msra.mxu0 0.0
    %891 = vmatprep.subr.mxu0 0.0
    %892 = vmatpush1.msra.mxu0 0.0
    %893 = vmatprep.subr.mxu0 0.0
    %894 = vmatpush1.msra.mxu0 0.0
    %895 = vmatprep.subr.mxu0 0.0
    %896 = vmatpush1.msra.mxu0 0.0
    %897 = vmatprep.subr.mxu0 0.0
    %898 = vmatpush1.msra.mxu0 0.0
    %899 = vmatprep.subr.mxu0 0.0
    %900 = vmatpush1.msra.mxu0 0.0
    %901 = vmatprep.subr.mxu0 0.0
    %902 = vmatpush1.msra.mxu0 0.0
    %903 = vmatprep.subr.mxu0 0.0
    %904 = vmatpush1.msra.mxu0 0.0
    %905 = vmatprep.subr.mxu0 0.0
    %906 = vmatpush1.msra.mxu0 0.0
    %907 = vmatprep.subr.mxu0 0.0
    %908 = vmatpush1.msra.mxu0 0.0
    %909 = vmatprep.subr.mxu0 0.0
    %910 = vmatpush1.msra.mxu0 0.0
    %911 = vmatprep.subr.mxu0 0.0
    %912 = vmatpush1.msra.mxu0 0.0
    %913 = vmatprep.subr.mxu0 0.0
    %914 = vmatpush1.msra.mxu0 0.0
    %915 = vmatprep.subr.mxu0 0.0
    %916 = vmatpush1.msra.mxu0 0.0
    %917 = vmatprep.subr.mxu0 0.0
    %918 = vmatpush1.msra.mxu0 0.0
    %919 = vmatprep.subr.mxu0 0.0
    %920 = vmatpush1.msra.mxu0 0.0
    %921 = vmatprep.subr.mxu0 0.0
    %922 = vmatpush1.msra.mxu0 0.0
    %923 = vmatprep.mubr.f32.mxu0 0.0
    %924 = vmatmul.mubr.f32.gmra.mrb[0].mxu0 %v854
    %v925 = vpop.f32.mrb[0].mxu0
    %v926 = vadd.f32 %v852, %v925
    %v927 = vpop.f32.mrb[0].mxu0
    %928 = vdwg.mxu0
    %929 = vst [vmem:[#allocation5] sm:$0xff] %v926
    // Predicated region
    $region26: #{tpu_custom_call.1} parent=1 // pred_check
      _
    $region27: #{tpu_custom_call.1} parent=1 // pred_check_branch
      %931 = sbr.rel (0) target = $region29
    $region28: #{tpu_custom_call.1} parent=1 // pred_region
      %s933 = ssub.s32 128, 128
      %934 = vsyncadd [#allocation4], %s933
      %s936 = sshll.u32 [#allocation5], 4
      %s937 = int_to_ptr.vmem [resolvable:$true] %s936
      %939 = dma.vmem_to_hbm [thread:$0]  %s937, 128, %s5, [#allocation4]
    $region29: #{tpu_custom_call.1} parent=1 // pred_fallthru
      _
    // Predicated region
    $region30: #{tpu_custom_call.1} parent=1 // pred_check
      _
    $region31: #{tpu_custom_call.1} parent=1 // pred_check_branch
      %941 = sbr.rel (0) target = $region33
    $region32: #{tpu_custom_call.1} parent=1 // pred_region
      %942 = dma.done [#allocation4], 128
    $region33: #{tpu_custom_call.1} parent=1 // pred_fallthru
      _
    %943 = vsyncpa [#allocation3], 1
    %944 = vsyncpa [#allocation4], 1

</llo_original>
